<compile_context>
chip_gen: v7x
topology: tpu7x:2x2x1
jax: 0.10.0
libtpu: 0.0.40
codegen_flags: <defaults>
</compile_context>

<pallas_src>
import functools

import jax
import jax.numpy as jnp
from jax.experimental import pallas as pl
from jax.experimental.pallas import tpu as pltpu


def _erf(x):
    # TODO(synk): lax.erf has no guaranteed Mosaic lowering; use Abramowitz &
    # Stegun 7.1.26 (max abs err ~1.5e-7) so exact-GELU matches to f32 noise.
    a1, a2, a3, a4, a5 = 0.254829592, -0.284496736, 1.421413741, -1.453152027, 1.061405429
    p = 0.3275911
    ax = jnp.abs(x)
    t = 1.0 / (1.0 + p * ax)          # exact divide: protects the 1e-4 parity budget
    poly = ((((a5 * t + a4) * t + a3) * t + a2) * t + a1) * t
    y = 1.0 - poly * jnp.exp(-ax * ax)
    return jnp.where(x >= 0, y, -y)


def _msfn_kernel(x_ref, g_ref, b_ref, seg_ref, segt_ref, w1_ref, tap_ref, w2_ref,
                 o_ref, *, eps, W):
    C, N = x_ref.shape                 # N = Bt * H * W  (lane-dense slab)

    def mm(a, b):                      # plain (M,K) x (K,N) on the MXU, f32 accumulate
        return jax.lax.dot_general(a, b, (((1,), (0,)), ((), ())),
                                   preferred_element_type=jnp.float32)

    xb = x_ref[...]                    # (C, N) float32

    # --- LayerNorm over the original NCHW last axis (W), fused stats --------
    # One segment matmul (seg entries are 1/W) gives per-(c, image-row) E[x]
    # and E[x^2] from the sublane-stacked operand; var = E[x^2] - mean^2.
    sums = mm(jnp.concatenate([xb, xb * xb], axis=0), seg_ref[...])    # (2C, G)
    mean = sums[:C]
    var = sums[C:] - mean * mean
    stats = jnp.concatenate([mean, jax.lax.rsqrt(var + eps)], axis=0)  # (2C, G)
    bstat = mm(stats, segt_ref[...])                                   # (2C, N)
    xn = (xb - bstat[:C]) * bstat[C:] * g_ref[...] + b_ref[...]        # (C, N)

    # --- pw1: 1x1 conv == (hid, C) @ (C, N) ----------------------------------
    y = mm(w1_ref[...], xn)                                            # (hid, N)

    # --- depthwise 3x3, stride 1, padding 1: factored rolls + masked planes --
    # tap_ref[(dh+1)*3 + (dw+1)] already contains wd[c, dh+1, dw+1] multiplied
    # by the w-validity mask and the pre-roll h-validity mask, so every border,
    # cross-image and slab-wrap read is zeroed without extra VPU ops.
    s_m1 = pltpu.roll(y, 1, axis=1)        # s_m1[q] = y[q-1]   (dw = -1)
    s_p1 = pltpu.roll(y, N - 1, axis=1)    # s_p1[q] = y[q+1]   (dw = +1)

    def row(dh):                           # weighted sum over dw for one row offset
        k = (dh + 1) * 3
        return tap_ref[k] * s_m1 + tap_ref[k + 1] * y + tap_ref[k + 2] * s_p1

    acc = (row(0)
           + pltpu.roll(row(-1), W, axis=1)       # out[p] += u_{-1}[p - W]
           + pltpu.roll(row(1), N - W, axis=1))   # out[p] += u_{+1}[p + W]

    # --- GELU (erf form, matches torch nn.GELU default) ----------------------
    z = 0.5 * acc * (1.0 + _erf(acc * 0.7071067811865476))

    # --- pw2: 1x1 conv == (C, hid) @ (hid, N) ---------------------------------
    o_ref[...] = mm(w2_ref[...], z)                                    # (C, N)


def _vmem_budget_bytes():
    # Generation-aware per-step budget: ~1/4 of physical VMEM (v5e/v6e 128 MiB,
    # v7x 64 MiB), clamped so the double-buffered blocks stay well under the
    # scoped limit on every generation.
    try:
        phys = int(pltpu.get_tpu_info().vmem_capacity_bytes)
    except Exception:                       # unknown runtime: assume smallest (v7x)
        phys = 64 * 1024 * 1024
    return max(8 * 1024 * 1024, min(phys // 4, 32 * 1024 * 1024))


def msfn_forward(x, gamma, beta, w1, wd, w2, eps=1e-6):
    """x: (B, C, H, W) float32, PyTorch NCHW convention."""
    B, C, H, W = x.shape
    assert W == C, "literal PyTorch LayerNorm broadcast requires W == dim"
    hid = w1.shape[0]
    HW = H * W
    # Per-step block last dim is Bt*HW; keep it lane-aligned.
    assert HW % 128 == 0, "per-image H*W must be a multiple of 128"

    # --- choose images-per-step Bt -------------------------------------------
    budget = _vmem_budget_bytes()

    def step_bytes(bt):
        n, g = bt * HW, bt * H
        return 4 * (2 * 2 * C * n        # x + out blocks, double-buffered
                    + 9 * hid * n        # masked tap planes
                    + 2 * n * g          # seg + segT
                    + 2 * n              # gamma / beta rows
                    + 2 * hid * C)       # pw1 / pw2 weights

    bt_cap = min(B, 64)
    while bt_cap > 1 and step_bytes(bt_cap) > budget:
        bt_cap -= 1
    if B >= 2:
        bt_cap = min(bt_cap, B // 2)     # >= 2 grid steps keeps both v7x TCs busy
    Bt = 1
    for cand in range(max(bt_cap, 1), 0, -1):
        if B % cand == 0:
            Bt = cand
            break
    N = Bt * HW                          # lanes per grid step
    G = Bt * H                           # LayerNorm groups (image-row) per step
    grid = (B // Bt,)

    f32 = jnp.float32
    # Channel-major slab: one tiny one-off XLA transpose so the kernel sees a
    # single lane-dense (C, Bt*HW) tile per step with no per-image structure.
    x_cn = x.astype(f32).reshape(B, C, HW).transpose(1, 0, 2).reshape(C, B * HW)

    g_row = jnp.tile(gamma.astype(f32), G).reshape(1, N)   # gamma[p % W]
    b_row = jnp.tile(beta.astype(f32), G).reshape(1, N)

    # Segment matrices mapping slab position p -> LN group p // W.
    grp = jnp.arange(N, dtype=jnp.int32) // W
    onehot = (grp[:, None] == jnp.arange(G, dtype=jnp.int32)[None, :]).astype(f32)
    seg = onehot * (1.0 / W)             # (N, G): one matmul yields means directly
    seg_t = jnp.transpose(onehot)        # (G, N): broadcast stats back to lanes

    w1f = w1.reshape(hid, C).astype(f32)
    w2f = w2.reshape(C, hid).astype(f32)

    # Pre-masked depthwise tap planes (9, hid, N):
    #   tap[(dh+1)*3+(dw+1)][c, q] = wd[c, dh+1, dw+1]
    #                                * [0 <= w(q)+dw < W]          (w validity)
    #                                * (pre-roll h validity for dh)
    # The pre-roll h mask (dh=+1 -> h(q)>=1, dh=-1 -> h(q)<=H-2) also zeroes
    # every cross-image / slab-wrap read introduced by the circular rolls.
    q = jnp.arange(N, dtype=jnp.int32)
    h_q = (q % HW) // W
    w_q = q % W
    ones = jnp.ones((N,), f32)
    w_ok = {-1: (w_q >= 1).astype(f32), 0: ones, 1: (w_q <= W - 2).astype(f32)}
    h_pre = {-1: (h_q <= H - 2).astype(f32), 0: ones, 1: (h_q >= 1).astype(f32)}
    wdf = wd.reshape(hid, 3, 3).astype(f32)
    taps = jnp.stack(
        [wdf[:, dh + 1, dw + 1][:, None] * (w_ok[dw] * h_pre[dh])[None, :]
         for dh in (-1, 0, 1) for dw in (-1, 0, 1)], axis=0)          # (9, hid, N)

    grid_spec = pltpu.PrefetchScalarGridSpec(
        num_scalar_prefetch=0,
        grid=grid,
        in_specs=[
            pl.BlockSpec((C, N), lambda b: (0, b)),
            pl.BlockSpec((1, N), lambda b: (0, 0)),
            pl.BlockSpec((1, N), lambda b: (0, 0)),
            pl.BlockSpec((N, G), lambda b: (0, 0)),
            pl.BlockSpec((G, N), lambda b: (0, 0)),
            pl.BlockSpec((hid, C), lambda b: (0, 0)),
            pl.BlockSpec((9, hid, N), lambda b: (0, 0, 0)),
            pl.BlockSpec((C, hid), lambda b: (0, 0)),
        ],
        out_specs=pl.BlockSpec((C, N), lambda b: (0, b)),
    )
    out_cn = pl.pallas_call(
        functools.partial(_msfn_kernel, eps=float(eps), W=W),
        out_shape=jax.ShapeDtypeStruct((C, B * HW), jnp.float32),
        grid_spec=grid_spec,
        compiler_params=pltpu.CompilerParams(
            dimension_semantics=("parallel",)),   # batch blocks are independent
    )(x_cn, g_row, b_row, seg, seg_t, w1f, taps, w2f)

    return out_cn.reshape(C, B, HW).transpose(1, 0, 2).reshape(B, C, H, W)


def msfn_reference(x, gamma, beta, w1, wd, w2, eps=1e-6):
    """Pure-JAX replica of the PyTorch forward (NCHW), for verification."""
    mean = x.mean(-1, keepdims=True)
    var = ((x - mean) ** 2).mean(-1, keepdims=True)
    xn = (x - mean) / jnp.sqrt(var + eps) * gamma + beta
    y = jnp.einsum('nchw,oc->nohw', xn, w1)
    H, W = x.shape[2], x.shape[3]
    yp = jnp.pad(y, ((0, 0), (0, 0), (1, 1), (1, 1)))
    z = jnp.zeros_like(y)
    for kh in range(3):
        for kw in range(3):
            z = z + wd[:, 0, kh, kw][None, :, None, None] * yp[:, :, kh:kh + H, kw:kw + W]
    z = 0.5 * z * (1.0 + jax.scipy.special.erf(z / jnp.sqrt(2.0)))
    return jnp.einsum('nohw,co->nchw', z, w2)


if __name__ == "__main__":
    key = jax.random.PRNGKey(0)
    B, dim, H, W = 2, 16, 16, 16          # W == dim, as the module's forward requires
    hidden = int(dim * 2.66)              # 42

    kx, kg, kb, k1, kd, k2 = jax.random.split(key, 6)
    x = jax.random.normal(kx, (B, dim, H, W), jnp.float32)
    gamma = 1.0 + 0.1 * jax.random.normal(kg, (dim,), jnp.float32)
    beta = 0.1 * jax.random.normal(kb, (dim,), jnp.float32)
    w1 = 0.1 * jax.random.normal(k1, (hidden, dim), jnp.float32)      # pw1 (1x1)
    wd = 0.1 * jax.random.normal(kd, (hidden, 1, 3, 3), jnp.float32)  # depthwise 3x3
    w2 = 0.1 * jax.random.normal(k2, (dim, hidden), jnp.float32)      # pw2 (1x1)

    out = jax.block_until_ready(msfn_forward(x, gamma, beta, w1, wd, w2))
    ref = msfn_reference(x, gamma, beta, w1, wd, w2)
    assert out.shape == (B, dim, H, W)
    max_err = float(jnp.max(jnp.abs(out - ref)))
    assert jnp.allclose(out, ref, atol=1e-4, rtol=1e-4), max_err
    print("KERNEL_OK")
</pallas_src>

<mosaic_0001>
module attributes {stable_mosaic.version = 11 : i64} {
  func.func @_msfn_kernel(%arg0: i32, %arg1: memref<16x256xf32, #tpu.memory_space<vmem>>, %arg2: memref<1x256xf32, #tpu.memory_space<vmem>>, %arg3: memref<1x256xf32, #tpu.memory_space<vmem>>, %arg4: memref<256x16xf32, #tpu.memory_space<vmem>>, %arg5: memref<16x256xf32, #tpu.memory_space<vmem>>, %arg6: memref<42x16xf32, #tpu.memory_space<vmem>>, %arg7: memref<9x42x256xf32, #tpu.memory_space<vmem>>, %arg8: memref<16x42xf32, #tpu.memory_space<vmem>>, %arg9: memref<16x256xf32, #tpu.memory_space<vmem>>) attributes {dimension_semantics = [#tpu.dimension_semantics<parallel>], iteration_bounds = array<i64: 2>, scalar_prefetch = 0 : i64, scratch_operands = 0 : i64, tpu.core_type = #tpu.core_type<tc>, window_params = [{transform_indices = @transform_0, window_bounds = array<i64: 16, 256>}, {pipeline_mode = #tpu.pipeline_mode<synchronous>, transform_indices = @transform_1, window_bounds = array<i64: 1, 256>}, {pipeline_mode = #tpu.pipeline_mode<synchronous>, transform_indices = @transform_2, window_bounds = array<i64: 1, 256>}, {pipeline_mode = #tpu.pipeline_mode<synchronous>, transform_indices = @transform_3, window_bounds = array<i64: 256, 16>}, {pipeline_mode = #tpu.pipeline_mode<synchronous>, transform_indices = @transform_4, window_bounds = array<i64: 16, 256>}, {pipeline_mode = #tpu.pipeline_mode<synchronous>, transform_indices = @transform_5, window_bounds = array<i64: 42, 16>}, {pipeline_mode = #tpu.pipeline_mode<synchronous>, transform_indices = @transform_6, window_bounds = array<i64: 9, 42, 256>}, {pipeline_mode = #tpu.pipeline_mode<synchronous>, transform_indices = @transform_7, window_bounds = array<i64: 16, 42>}, {transform_indices = @transform_8, window_bounds = array<i64: 16, 256>}]} {
    %c0 = arith.constant 0 : index
    %c0_0 = arith.constant 0 : index
    %0 = vector.load %arg1[%c0, %c0_0] : memref<16x256xf32, #tpu.memory_space<vmem>>, vector<16x256xf32>
    %1 = arith.mulf %0, %0 : vector<16x256xf32>
    %2 = tpu.concatenate %0, %1 in 0 : vector<16x256xf32>, vector<16x256xf32> -> vector<32x256xf32>
    %c0_1 = arith.constant 0 : index
    %c0_2 = arith.constant 0 : index
    %3 = vector.load %arg4[%c0_1, %c0_2] : memref<256x16xf32, #tpu.memory_space<vmem>>, vector<256x16xf32>
    %cst = arith.constant dense<0.000000e+00> : vector<32x16xf32>
    %4 = tpu.matmul %2, %3, %cst {dimension_numbers = #tpu.dot_dimension_numbers<[1], [0], [0], [1], [0, 0, 1, 1], [], []>} : vector<32x256xf32>, vector<256x16xf32>, vector<32x16xf32> -> vector<32x16xf32>
    %5 = vector.extract_strided_slice %4 {offsets = [0, 0], sizes = [16, 16], strides = [1, 1]} : vector<32x16xf32> to vector<16x16xf32>
    %6 = vector.extract_strided_slice %4 {offsets = [16, 0], sizes = [16, 16], strides = [1, 1]} : vector<32x16xf32> to vector<16x16xf32>
    %7 = arith.mulf %5, %5 : vector<16x16xf32>
    %8 = arith.subf %6, %7 : vector<16x16xf32>
    %cst_3 = arith.constant 9.99999997E-7 : f32
    %9 = vector.broadcast %cst_3 : f32 to vector<16x16xf32>
    %10 = arith.addf %8, %9 : vector<16x16xf32>
    %11 = math.rsqrt %10 : vector<16x16xf32>
    %12 = tpu.concatenate %5, %11 in 0 : vector<16x16xf32>, vector<16x16xf32> -> vector<32x16xf32>
    %c0_4 = arith.constant 0 : index
    %c0_5 = arith.constant 0 : index
    %13 = vector.load %arg5[%c0_4, %c0_5] : memref<16x256xf32, #tpu.memory_space<vmem>>, vector<16x256xf32>
    %cst_6 = arith.constant dense<0.000000e+00> : vector<32x256xf32>
    %14 = tpu.matmul %12, %13, %cst_6 {dimension_numbers = #tpu.dot_dimension_numbers<[1], [0], [0], [1], [0, 0, 1, 1], [], []>} : vector<32x16xf32>, vector<16x256xf32>, vector<32x256xf32> -> vector<32x256xf32>
    %15 = vector.extract_strided_slice %14 {offsets = [0, 0], sizes = [16, 256], strides = [1, 1]} : vector<32x256xf32> to vector<16x256xf32>
    %16 = arith.subf %0, %15 : vector<16x256xf32>
    %17 = vector.extract_strided_slice %14 {offsets = [16, 0], sizes = [16, 256], strides = [1, 1]} : vector<32x256xf32> to vector<16x256xf32>
    %18 = arith.mulf %16, %17 : vector<16x256xf32>
    %c0_7 = arith.constant 0 : index
    %c0_8 = arith.constant 0 : index
    %19 = vector.load %arg2[%c0_7, %c0_8] : memref<1x256xf32, #tpu.memory_space<vmem>>, vector<1x256xf32>
    %20 = vector.broadcast %19 : vector<1x256xf32> to vector<16x256xf32>
    %21 = arith.mulf %18, %20 : vector<16x256xf32>
    %c0_9 = arith.constant 0 : index
    %c0_10 = arith.constant 0 : index
    %22 = vector.load %arg3[%c0_9, %c0_10] : memref<1x256xf32, #tpu.memory_space<vmem>>, vector<1x256xf32>
    %23 = vector.broadcast %22 : vector<1x256xf32> to vector<16x256xf32>
    %24 = arith.addf %21, %23 : vector<16x256xf32>
    %c0_11 = arith.constant 0 : index
    %c0_12 = arith.constant 0 : index
    %25 = vector.load %arg6[%c0_11, %c0_12] : memref<42x16xf32, #tpu.memory_space<vmem>>, vector<42x16xf32>
    %cst_13 = arith.constant dense<0.000000e+00> : vector<42x256xf32>
    %26 = tpu.matmul %25, %24, %cst_13 {dimension_numbers = #tpu.dot_dimension_numbers<[1], [0], [0], [1], [0, 0, 1, 1], [], []>} : vector<42x16xf32>, vector<16x256xf32>, vector<42x256xf32> -> vector<42x256xf32>
    %c1_i32 = arith.constant 1 : i32
    %27 = tpu.dynamic_rotate %26 by %c1_i32 dim 1 : vector<42x256xf32>, i32 -> vector<42x256xf32>
    %c255_i32 = arith.constant 255 : i32
    %28 = tpu.dynamic_rotate %26 by %c255_i32 dim 1 : vector<42x256xf32>, i32 -> vector<42x256xf32>
    %c3 = arith.constant 3 : index
    %c0_14 = arith.constant 0 : index
    %c0_15 = arith.constant 0 : index
    %29 = vector.load %arg7[%c3, %c0_14, %c0_15] : memref<9x42x256xf32, #tpu.memory_space<vmem>>, vector<1x42x256xf32>
    %30 = vector.shape_cast %29 : vector<1x42x256xf32> to vector<42x256xf32>
    %31 = arith.mulf %30, %27 : vector<42x256xf32>
    %c4 = arith.constant 4 : index
    %c0_16 = arith.constant 0 : index
    %c0_17 = arith.constant 0 : index
    %32 = vector.load %arg7[%c4, %c0_16, %c0_17] : memref<9x42x256xf32, #tpu.memory_space<vmem>>, vector<1x42x256xf32>
    %33 = vector.shape_cast %32 : vector<1x42x256xf32> to vector<42x256xf32>
    %34 = arith.mulf %33, %26 : vector<42x256xf32>
    %35 = arith.addf %31, %34 : vector<42x256xf32>
    %c5 = arith.constant 5 : index
    %c0_18 = arith.constant 0 : index
    %c0_19 = arith.constant 0 : index
    %36 = vector.load %arg7[%c5, %c0_18, %c0_19] : memref<9x42x256xf32, #tpu.memory_space<vmem>>, vector<1x42x256xf32>
    %37 = vector.shape_cast %36 : vector<1x42x256xf32> to vector<42x256xf32>
    %38 = arith.mulf %37, %28 : vector<42x256xf32>
    %39 = arith.addf %35, %38 : vector<42x256xf32>
    %c0_20 = arith.constant 0 : index
    %c0_21 = arith.constant 0 : index
    %c0_22 = arith.constant 0 : index
    %40 = vector.load %arg7[%c0_20, %c0_21, %c0_22] : memref<9x42x256xf32, #tpu.memory_space<vmem>>, vector<1x42x256xf32>
    %41 = vector.shape_cast %40 : vector<1x42x256xf32> to vector<42x256xf32>
    %42 = arith.mulf %41, %27 : vector<42x256xf32>
    %c1 = arith.constant 1 : index
    %c0_23 = arith.constant 0 : index
    %c0_24 = arith.constant 0 : index
    %43 = vector.load %arg7[%c1, %c0_23, %c0_24] : memref<9x42x256xf32, #tpu.memory_space<vmem>>, vector<1x42x256xf32>
    %44 = vector.shape_cast %43 : vector<1x42x256xf32> to vector<42x256xf32>
    %45 = arith.mulf %44, %26 : vector<42x256xf32>
    %46 = arith.addf %42, %45 : vector<42x256xf32>
    %c2 = arith.constant 2 : index
    %c0_25 = arith.constant 0 : index
    %c0_26 = arith.constant 0 : index
    %47 = vector.load %arg7[%c2, %c0_25, %c0_26] : memref<9x42x256xf32, #tpu.memory_space<vmem>>, vector<1x42x256xf32>
    %48 = vector.shape_cast %47 : vector<1x42x256xf32> to vector<42x256xf32>
    %49 = arith.mulf %48, %28 : vector<42x256xf32>
    %50 = arith.addf %46, %49 : vector<42x256xf32>
    %c16_i32 = arith.constant 16 : i32
    %51 = tpu.dynamic_rotate %50 by %c16_i32 dim 1 : vector<42x256xf32>, i32 -> vector<42x256xf32>
    %52 = arith.addf %39, %51 : vector<42x256xf32>
    %c6 = arith.constant 6 : index
    %c0_27 = arith.constant 0 : index
    %c0_28 = arith.constant 0 : index
    %53 = vector.load %arg7[%c6, %c0_27, %c0_28] : memref<9x42x256xf32, #tpu.memory_space<vmem>>, vector<1x42x256xf32>
    %54 = vector.shape_cast %53 : vector<1x42x256xf32> to vector<42x256xf32>
    %55 = arith.mulf %54, %27 : vector<42x256xf32>
    %c7 = arith.constant 7 : index
    %c0_29 = arith.constant 0 : index
    %c0_30 = arith.constant 0 : index
    %56 = vector.load %arg7[%c7, %c0_29, %c0_30] : memref<9x42x256xf32, #tpu.memory_space<vmem>>, vector<1x42x256xf32>
    %57 = vector.shape_cast %56 : vector<1x42x256xf32> to vector<42x256xf32>
    %58 = arith.mulf %57, %26 : vector<42x256xf32>
    %59 = arith.addf %55, %58 : vector<42x256xf32>
    %c8 = arith.constant 8 : index
    %c0_31 = arith.constant 0 : index
    %c0_32 = arith.constant 0 : index
    %60 = vector.load %arg7[%c8, %c0_31, %c0_32] : memref<9x42x256xf32, #tpu.memory_space<vmem>>, vector<1x42x256xf32>
    %61 = vector.shape_cast %60 : vector<1x42x256xf32> to vector<42x256xf32>
    %62 = arith.mulf %61, %28 : vector<42x256xf32>
    %63 = arith.addf %59, %62 : vector<42x256xf32>
    %c240_i32 = arith.constant 240 : i32
    %64 = tpu.dynamic_rotate %63 by %c240_i32 dim 1 : vector<42x256xf32>, i32 -> vector<42x256xf32>
    %65 = arith.addf %52, %64 : vector<42x256xf32>
    %cst_33 = arith.constant 5.000000e-01 : f32
    %66 = vector.broadcast %cst_33 : f32 to vector<42x256xf32>
    %67 = arith.mulf %66, %65 : vector<42x256xf32>
    %cst_34 = arith.constant 0.707106769 : f32
    %68 = vector.broadcast %cst_34 : f32 to vector<42x256xf32>
    %69 = arith.mulf %65, %68 : vector<42x256xf32>
    %70 = math.absf %69 : vector<42x256xf32>
    %cst_35 = arith.constant 0.327591091 : f32
    %71 = vector.broadcast %cst_35 : f32 to vector<42x256xf32>
    %72 = arith.mulf %71, %70 : vector<42x256xf32>
    %cst_36 = arith.constant 1.000000e+00 : f32
    %73 = vector.broadcast %cst_36 : f32 to vector<42x256xf32>
    %74 = arith.addf %73, %72 : vector<42x256xf32>
    %cst_37 = arith.constant 1.000000e+00 : f32
    %75 = vector.broadcast %cst_37 : f32 to vector<42x256xf32>
    %76 = arith.divf %75, %74 : vector<42x256xf32>
    %cst_38 = arith.constant 1.06140542 : f32
    %77 = vector.broadcast %cst_38 : f32 to vector<42x256xf32>
    %78 = arith.mulf %77, %76 : vector<42x256xf32>
    %cst_39 = arith.constant -1.45315206 : f32
    %79 = vector.broadcast %cst_39 : f32 to vector<42x256xf32>
    %80 = arith.addf %78, %79 : vector<42x256xf32>
    %81 = arith.mulf %80, %76 : vector<42x256xf32>
    %cst_40 = arith.constant 1.42141378 : f32
    %82 = vector.broadcast %cst_40 : f32 to vector<42x256xf32>
    %83 = arith.addf %81, %82 : vector<42x256xf32>
    %84 = arith.mulf %83, %76 : vector<42x256xf32>
    %cst_41 = arith.constant -0.284496725 : f32
    %85 = vector.broadcast %cst_41 : f32 to vector<42x256xf32>
    %86 = arith.addf %84, %85 : vector<42x256xf32>
    %87 = arith.mulf %86, %76 : vector<42x256xf32>
    %cst_42 = arith.constant 0.254829586 : f32
    %88 = vector.broadcast %cst_42 : f32 to vector<42x256xf32>
    %89 = arith.addf %87, %88 : vector<42x256xf32>
    %90 = arith.mulf %89, %76 : vector<42x256xf32>
    %cst_43 = arith.constant 0.000000e+00 : f32
    %91 = vector.broadcast %cst_43 : f32 to vector<42x256xf32>
    %92 = arith.subf %91, %70 : vector<42x256xf32>
    %93 = arith.mulf %92, %70 : vector<42x256xf32>
    %94 = math.exp %93 : vector<42x256xf32>
    %95 = arith.mulf %90, %94 : vector<42x256xf32>
    %cst_44 = arith.constant 1.000000e+00 : f32
    %96 = vector.broadcast %cst_44 : f32 to vector<42x256xf32>
    %97 = arith.subf %96, %95 : vector<42x256xf32>
    %cst_45 = arith.constant 0.000000e+00 : f32
    %98 = vector.broadcast %cst_45 : f32 to vector<42x256xf32>
    %99 = arith.cmpf oge, %69, %98 : vector<42x256xf32>
    %cst_46 = arith.constant 0.000000e+00 : f32
    %100 = vector.broadcast %cst_46 : f32 to vector<42x256xf32>
    %101 = arith.subf %100, %97 : vector<42x256xf32>
    %102 = arith.select %99, %97, %101 : vector<42x256xi1>, vector<42x256xf32>
    %cst_47 = arith.constant 1.000000e+00 : f32
    %103 = vector.broadcast %cst_47 : f32 to vector<42x256xf32>
    %104 = arith.addf %103, %102 : vector<42x256xf32>
    %105 = arith.mulf %67, %104 : vector<42x256xf32>
    %c0_48 = arith.constant 0 : index
    %c0_49 = arith.constant 0 : index
    %106 = vector.load %arg8[%c0_48, %c0_49] : memref<16x42xf32, #tpu.memory_space<vmem>>, vector<16x42xf32>
    %cst_50 = arith.constant dense<0.000000e+00> : vector<16x256xf32>
    %107 = tpu.matmul %106, %105, %cst_50 {dimension_numbers = #tpu.dot_dimension_numbers<[1], [0], [0], [1], [0, 0, 1, 1], [], []>} : vector<16x42xf32>, vector<42x256xf32>, vector<16x256xf32> -> vector<16x256xf32>
    %c0_51 = arith.constant 0 : index
    %c0_52 = arith.constant 0 : index
    %108 = vector.load %arg9[%c0_51, %c0_52] : memref<16x256xf32, #tpu.memory_space<vmem>>, vector<16x256xf32>
    tpu.vector_store %arg9[%c0_51, %c0_52], %107 {strides = array<i32>} : memref<16x256xf32, #tpu.memory_space<vmem>>, vector<16x256xf32>,
    return
  }
  func.func @transform_0(%arg0: i32) -> (i32, i32) {
    %c0_i32 = arith.constant 0 : i32
    %c0_i32_0 = arith.constant 0 : i32
    return %c0_i32, %arg0 : i32, i32
  }
  func.func @transform_1(%arg0: i32) -> (i32, i32) {
    %c0_i32 = arith.constant 0 : i32
    %c0_i32_0 = arith.constant 0 : i32
    %c0_i32_1 = arith.constant 0 : i32
    return %c0_i32, %c0_i32_0 : i32, i32
  }
  func.func @transform_2(%arg0: i32) -> (i32, i32) {
    %c0_i32 = arith.constant 0 : i32
    %c0_i32_0 = arith.constant 0 : i32
    %c0_i32_1 = arith.constant 0 : i32
    return %c0_i32, %c0_i32_0 : i32, i32
  }
  func.func @transform_3(%arg0: i32) -> (i32, i32) {
    %c0_i32 = arith.constant 0 : i32
    %c0_i32_0 = arith.constant 0 : i32
    %c0_i32_1 = arith.constant 0 : i32
    return %c0_i32, %c0_i32_0 : i32, i32
  }
  func.func @transform_4(%arg0: i32) -> (i32, i32) {
    %c0_i32 = arith.constant 0 : i32
    %c0_i32_0 = arith.constant 0 : i32
    %c0_i32_1 = arith.constant 0 : i32
    return %c0_i32, %c0_i32_0 : i32, i32
  }
  func.func @transform_5(%arg0: i32) -> (i32, i32) {
    %c0_i32 = arith.constant 0 : i32
    %c0_i32_0 = arith.constant 0 : i32
    %c0_i32_1 = arith.constant 0 : i32
    return %c0_i32, %c0_i32_0 : i32, i32
  }
  func.func @transform_6(%arg0: i32) -> (i32, i32, i32) {
    %c0_i32 = arith.constant 0 : i32
    %c0_i32_0 = arith.constant 0 : i32
    %c0_i32_1 = arith.constant 0 : i32
    %c0_i32_2 = arith.constant 0 : i32
    return %c0_i32, %c0_i32_0, %c0_i32_1 : i32, i32, i32
  }
  func.func @transform_7(%arg0: i32) -> (i32, i32) {
    %c0_i32 = arith.constant 0 : i32
    %c0_i32_0 = arith.constant 0 : i32
    %c0_i32_1 = arith.constant 0 : i32
    return %c0_i32, %c0_i32_0 : i32, i32
  }
  func.func @transform_8(%arg0: i32) -> (i32, i32) {
    %c0_i32 = arith.constant 0 : i32
    %c0_i32_0 = arith.constant 0 : i32
    return %c0_i32, %arg0 : i32, i32
  }
}

</mosaic_0001>

<llo_original>
// kernel: tpu_custom_call.1
$region0: #{tpu_custom_call.1}
  #allocation0 [shape = 'u32[]', space=smem, size = 0x4, offset = 0x4, fixed_abs, tag = 'smem constant byte address 0x4 - core index']
  #allocation1 [shape = 'u32[144,128]{1,0:T(1,128)}', space=vmem, size = 0x12000, scoped, tag = 'internal scratch']
  %s0 = inlined_call_operand.vmem [shape: f32[16,512], index: 0, kind: input, shape index: {}]
  %s1 = inlined_call_operand.vmem [shape: f32[1,256], index: 1, kind: input, shape index: {}]
  %s2 = inlined_call_operand.vmem [shape: f32[1,256], index: 2, kind: input, shape index: {}]
  %s3 = inlined_call_operand.vmem [shape: f32[256,16], index: 3, kind: input, shape index: {}]
  %s4 = inlined_call_operand.vmem [shape: f32[16,256], index: 4, kind: input, shape index: {}]
  %s5 = inlined_call_operand.vmem [shape: f32[42,16], index: 5, kind: input, shape index: {}]
  %s6 = inlined_call_operand.hbm [shape: f32[9,42,256], index: 6, kind: input, shape index: {}]
  %s7 = inlined_call_operand.vmem [shape: f32[16,42], index: 7, kind: input, shape index: {}]
  %s8 = inlined_call_operand.hbm [shape: f32[16,512], index: 8, kind: output, shape index: {}]
  %s9 = sld [smem:[#allocation0]]
  $region92: #{tpu_custom_call.1} parent=0
    _
  %s11 = ssub.s32 1, %s9
  %s12 = scalar_select 0, %s11, %s9
  $region1: #{tpu_custom_call.1} parent=0
    #allocation2 [shape = 'u8[32768]{0}', space=vmem, size = 0x8000, scoped, tag = 'input window, operand 0']
    #allocation3 [shape = 'u8[442368]{0}', space=vmem, size = 0x6c000, scoped, tag = 'input window, operand 6, single buffered']
    #allocation4 [shape = 's32[2]{0}', space=sflag, size = 0x8, scoped, tag = 'scoped memory for tpu_custom_call.1']
    #allocation5 [shape = 's32[2]{0}', space=sflag, size = 0x8, scoped, tag = 'scoped memory for tpu_custom_call.1']
    #allocation6 [shape = 'u8[32768]{0}', space=vmem, size = 0x8000, scoped, tag = 'output window, operand 0']
    %13 = vsyncpa [#allocation4], 0
    %14 = vsyncpa [#allocation5], 0
    %s15 = scalar_lea.sflag [#allocation5], 1
    %16 = vsyncpa %s15, 0
    loop: start=0, step=1, limit=4
    $region2: #{tpu_custom_call.1} parent=1 // loop_pre_header
      _
    $region3: #{tpu_custom_call.1} parent=1 // loop_header
      %s18 = sphi 0, %s22
      %p19 = scmp.ge.s32.totalorder %s18, 4
      %s28 = sphi 0, %s30
      %s31 = sphi 0, %s28
      %s32 = sphi 0, %s31
      %s48 = sphi 0, %s32
      %s52 = sphi 0, %s52
      %s54 = sphi 0, %s52
      %s55 = sphi 0, %s54
      %s69 = sphi 0, %s55
      %s73 = sphi 0, %s73
      %s75 = sphi 0, %s73
      %s76 = sphi 0, %s75
      %s90 = sphi 0, %s76
      %s94 = sphi 0, %s94
      %s96 = sphi 0, %s94
      %s97 = sphi 0, %s96
      %s111 = sphi 0, %s97
      %s115 = sphi 0, %s115
      %s117 = sphi 0, %s115
      %s118 = sphi 0, %s117
      %s132 = sphi 0, %s118
      %s136 = sphi 0, %s136
      %s138 = sphi 0, %s136
      %s139 = sphi 0, %s138
      %s153 = sphi 0, %s139
      %s157 = sphi 0, %s157
      %s159 = sphi 0, %s157
      %s160 = sphi 0, %s159
      %s174 = sphi 0, %s160
      %s178 = sphi 0, %s178
      %s180 = sphi 0, %s178
      %s181 = sphi 0, %s180
      %s195 = sphi 0, %s181
      %s201 = sphi 0, %s203
      %s204 = sphi 0, %s201
      %s205 = sphi 0, %s204
      %s221 = sphi 0, %s205
    $region4: #{tpu_custom_call.1} parent=1 // loop_header_branch
      %21 = sbr.rel (%p19) target = $region8
    $region5: #{tpu_custom_call.1} parent=1 // loop_body
      %s23 = ssub.s32 %s18, 1
      %s24 = ssub.s32 %s18, 2
      %s25 = sadd.s32 %s18, 1
      %s26 = ssub.s32 %s18, %s25
      %p27 = scmp.eq.s32.totalorder %s26, 0
      %s29 = sadd.s32 %s28, 1
      %s30 = scalar_select %p27, %s28, %s29
      %p33 = pneg %p27
      %p34 = scmp.eq.s32.totalorder %s18, 1
      %p35 = por %p33, %p34
      %p36 = scmp.ne.s32.totalorder %s28, %s31
      %p37 = scmp.eq.s32.totalorder %s18, 0
      %p38 = por %p36, %p37
      %p39 = scmp.ne.s32.totalorder %s28, %s31
      %p40 = scmp.eq.s32.totalorder %s23, 1
      %p41 = por %p39, %p40
      %p42 = scmp.ne.s32.totalorder %s31, %s32
      %p43 = scmp.eq.s32.totalorder %s23, 0
      %p44 = por %p42, %p43
      %p45 = scmp.ne.s32.totalorder %s31, %s32
      %p46 = scmp.eq.s32.totalorder %s24, 1
      %p47 = por %p45, %p46
      %p49 = scmp.ne.s32.totalorder %s32, %s48
      %p50 = scmp.eq.s32.totalorder %s24, 0
      %p51 = por %p49, %p50
      %s53 = sadd.s32 %s52, 1
      %p56 = scmp.eq.s32.totalorder %s18, 1
      %p57 = scmp.ne.s32.totalorder %s52, %s54
      %p58 = scmp.eq.s32.totalorder %s18, 0
      %p59 = por %p57, %p58
      %p60 = scmp.ne.s32.totalorder %s52, %s54
      %p61 = scmp.eq.s32.totalorder %s23, 1
      %p62 = por %p60, %p61
      %p63 = scmp.ne.s32.totalorder %s54, %s55
      %p64 = scmp.eq.s32.totalorder %s23, 0
      %p65 = por %p63, %p64
      %p66 = scmp.ne.s32.totalorder %s54, %s55
      %p67 = scmp.eq.s32.totalorder %s24, 1
      %p68 = por %p66, %p67
      %p70 = scmp.ne.s32.totalorder %s55, %s69
      %p71 = scmp.eq.s32.totalorder %s24, 0
      %p72 = por %p70, %p71
      %s74 = sadd.s32 %s73, 1
      %p77 = scmp.eq.s32.totalorder %s18, 1
      %p78 = scmp.ne.s32.totalorder %s73, %s75
      %p79 = scmp.eq.s32.totalorder %s18, 0
      %p80 = por %p78, %p79
      %p81 = scmp.ne.s32.totalorder %s73, %s75
      %p82 = scmp.eq.s32.totalorder %s23, 1
      %p83 = por %p81, %p82
      %p84 = scmp.ne.s32.totalorder %s75, %s76
      %p85 = scmp.eq.s32.totalorder %s23, 0
      %p86 = por %p84, %p85
      %p87 = scmp.ne.s32.totalorder %s75, %s76
      %p88 = scmp.eq.s32.totalorder %s24, 1
      %p89 = por %p87, %p88
      %p91 = scmp.ne.s32.totalorder %s76, %s90
      %p92 = scmp.eq.s32.totalorder %s24, 0
      %p93 = por %p91, %p92
      %s95 = sadd.s32 %s94, 1
      %p98 = scmp.eq.s32.totalorder %s18, 1
      %p99 = scmp.ne.s32.totalorder %s94, %s96
      %p100 = scmp.eq.s32.totalorder %s18, 0
      %p101 = por %p99, %p100
      %p102 = scmp.ne.s32.totalorder %s94, %s96
      %p103 = scmp.eq.s32.totalorder %s23, 1
      %p104 = por %p102, %p103
      %p105 = scmp.ne.s32.totalorder %s96, %s97
      %p106 = scmp.eq.s32.totalorder %s23, 0
      %p107 = por %p105, %p106
      %p108 = scmp.ne.s32.totalorder %s96, %s97
      %p109 = scmp.eq.s32.totalorder %s24, 1
      %p110 = por %p108, %p109
      %p112 = scmp.ne.s32.totalorder %s97, %s111
      %p113 = scmp.eq.s32.totalorder %s24, 0
      %p114 = por %p112, %p113
      %s116 = sadd.s32 %s115, 1
      %p119 = scmp.eq.s32.totalorder %s18, 1
      %p120 = scmp.ne.s32.totalorder %s115, %s117
      %p121 = scmp.eq.s32.totalorder %s18, 0
      %p122 = por %p120, %p121
      %p123 = scmp.ne.s32.totalorder %s115, %s117
      %p124 = scmp.eq.s32.totalorder %s23, 1
      %p125 = por %p123, %p124
      %p126 = scmp.ne.s32.totalorder %s117, %s118
      %p127 = scmp.eq.s32.totalorder %s23, 0
      %p128 = por %p126, %p127
      %p129 = scmp.ne.s32.totalorder %s117, %s118
      %p130 = scmp.eq.s32.totalorder %s24, 1
      %p131 = por %p129, %p130
      %p133 = scmp.ne.s32.totalorder %s118, %s132
      %p134 = scmp.eq.s32.totalorder %s24, 0
      %p135 = por %p133, %p134
      %s137 = sadd.s32 %s136, 1
      %p140 = scmp.eq.s32.totalorder %s18, 1
      %p141 = scmp.ne.s32.totalorder %s136, %s138
      %p142 = scmp.eq.s32.totalorder %s18, 0
      %p143 = por %p141, %p142
      %p144 = scmp.ne.s32.totalorder %s136, %s138
      %p145 = scmp.eq.s32.totalorder %s23, 1
      %p146 = por %p144, %p145
      %p147 = scmp.ne.s32.totalorder %s138, %s139
      %p148 = scmp.eq.s32.totalorder %s23, 0
      %p149 = por %p147, %p148
      %p150 = scmp.ne.s32.totalorder %s138, %s139
      %p151 = scmp.eq.s32.totalorder %s24, 1
      %p152 = por %p150, %p151
      %p154 = scmp.ne.s32.totalorder %s139, %s153
      %p155 = scmp.eq.s32.totalorder %s24, 0
      %p156 = por %p154, %p155
      %s158 = sadd.s32 %s157, 1
      %p161 = scmp.eq.s32.totalorder %s18, 1
      %p162 = scmp.ne.s32.totalorder %s157, %s159
      %p163 = scmp.eq.s32.totalorder %s18, 0
      %p164 = por %p162, %p163
      %p165 = scmp.ne.s32.totalorder %s157, %s159
      %p166 = scmp.eq.s32.totalorder %s23, 1
      %p167 = por %p165, %p166
      %p168 = scmp.ne.s32.totalorder %s159, %s160
      %p169 = scmp.eq.s32.totalorder %s23, 0
      %p170 = por %p168, %p169
      %p171 = scmp.ne.s32.totalorder %s159, %s160
      %p172 = scmp.eq.s32.totalorder %s24, 1
      %p173 = por %p171, %p172
      %p175 = scmp.ne.s32.totalorder %s160, %s174
      %p176 = scmp.eq.s32.totalorder %s24, 0
      %p177 = por %p175, %p176
      %s179 = sadd.s32 %s178, 1
      %p182 = scmp.eq.s32.totalorder %s18, 1
      %p183 = scmp.ne.s32.totalorder %s178, %s180
      %p184 = scmp.eq.s32.totalorder %s18, 0
      %p185 = por %p183, %p184
      %p186 = scmp.ne.s32.totalorder %s178, %s180
      %p187 = scmp.eq.s32.totalorder %s23, 1
      %p188 = por %p186, %p187
      %p189 = scmp.ne.s32.totalorder %s180, %s181
      %p190 = scmp.eq.s32.totalorder %s23, 0
      %p191 = por %p189, %p190
      %p192 = scmp.ne.s32.totalorder %s180, %s181
      %p193 = scmp.eq.s32.totalorder %s24, 1
      %p194 = por %p192, %p193
      %p196 = scmp.ne.s32.totalorder %s181, %s195
      %p197 = scmp.eq.s32.totalorder %s24, 0
      %p198 = por %p196, %p197
      %s199 = ssub.s32 %s18, %s25
      %p200 = scmp.eq.s32.totalorder %s199, 0
      %s202 = sadd.s32 %s201, 1
      %s203 = scalar_select %p200, %s201, %s202
      %p206 = pneg %p200
      %p207 = scmp.eq.s32.totalorder %s18, 1
      %p208 = por %p206, %p207
      %p209 = scmp.ne.s32.totalorder %s201, %s204
      %p210 = scmp.eq.s32.totalorder %s18, 0
      %p211 = por %p209, %p210
      %p212 = scmp.ne.s32.totalorder %s201, %s204
      %p213 = scmp.eq.s32.totalorder %s23, 1
      %p214 = por %p212, %p213
      %p215 = scmp.ne.s32.totalorder %s204, %s205
      %p216 = scmp.eq.s32.totalorder %s23, 0
      %p217 = por %p215, %p216
      %p218 = scmp.ne.s32.totalorder %s204, %s205
      %p219 = scmp.eq.s32.totalorder %s24, 1
      %p220 = por %p218, %p219
      %p222 = scmp.ne.s32.totalorder %s205, %s221
      %p223 = scmp.eq.s32.totalorder %s24, 0
      %p224 = por %p222, %p223
      %p225 = scmp.le.s32.totalorder 1, %s18
      %p226 = scmp.lt.s32.totalorder %s18, 3
      %p227 = pnand %p225, %p226
      %p228 = pneg %p227
      // Predicated region
      $region9: #{tpu_custom_call.1} parent=5 // pred_check
        _
      $region10: #{tpu_custom_call.1} parent=5 // pred_check_branch
        %230 = sbr.rel (%p227) target = $region12
      $region11: #{tpu_custom_call.1} parent=5 // pred_region
        %s231 = ssub.s32 %s18, 1
        // Predicated region
        $region13: #{tpu_custom_call.1} parent=11 // pred_check
          %p232 = pneg %p65
        $region14: #{tpu_custom_call.1} parent=11 // pred_check_branch
          %234 = sbr.rel (%p232) target = $region16
        $region15: #{tpu_custom_call.1} parent=11 // pred_region
          _
        $region16: #{tpu_custom_call.1} parent=11 // pred_fallthru
          _
        // Predicated region
        $region17: #{tpu_custom_call.1} parent=11 // pred_check
          %p235 = pneg %p86
        $region18: #{tpu_custom_call.1} parent=11 // pred_check_branch
          %237 = sbr.rel (%p235) target = $region20
        $region19: #{tpu_custom_call.1} parent=11 // pred_region
          _
        $region20: #{tpu_custom_call.1} parent=11 // pred_fallthru
          _
        // Predicated region
        $region21: #{tpu_custom_call.1} parent=11 // pred_check
          %p238 = pneg %p107
        $region22: #{tpu_custom_call.1} parent=11 // pred_check_branch
          %240 = sbr.rel (%p238) target = $region24
        $region23: #{tpu_custom_call.1} parent=11 // pred_region
          _
        $region24: #{tpu_custom_call.1} parent=11 // pred_fallthru
          _
        // Predicated region
        $region25: #{tpu_custom_call.1} parent=11 // pred_check
          %p241 = pneg %p128
        $region26: #{tpu_custom_call.1} parent=11 // pred_check_branch
          %243 = sbr.rel (%p241) target = $region28
        $region27: #{tpu_custom_call.1} parent=11 // pred_region
          _
        $region28: #{tpu_custom_call.1} parent=11 // pred_fallthru
          _
        // Predicated region
        $region29: #{tpu_custom_call.1} parent=11 // pred_check
          %p244 = pneg %p149
        $region30: #{tpu_custom_call.1} parent=11 // pred_check_branch
          %246 = sbr.rel (%p244) target = $region32
        $region31: #{tpu_custom_call.1} parent=11 // pred_region
          _
        $region32: #{tpu_custom_call.1} parent=11 // pred_fallthru
          _
        // Predicated region
        $region33: #{tpu_custom_call.1} parent=11 // pred_check
          %p247 = pneg %p170
        $region34: #{tpu_custom_call.1} parent=11 // pred_check_branch
          %249 = sbr.rel (%p247) target = $region36
        $region35: #{tpu_custom_call.1} parent=11 // pred_region
          %s251 = ssub.s32 13824, 13824
          %252 = vsyncadd [#allocation4], %s251
          %s253 = sshll.u32 [#allocation3], 4
          %s254 = int_to_ptr.vmem [resolvable:$true] %s253
          %259 = dma.hbm_to_vmem [thread:$0]  %s6, 13824, %s254, [#allocation4], 256, 256, 16
        $region36: #{tpu_custom_call.1} parent=11 // pred_fallthru
          _
        // Predicated region
        $region37: #{tpu_custom_call.1} parent=11 // pred_check
          %p260 = pneg %p191
        $region38: #{tpu_custom_call.1} parent=11 // pred_check_branch
          %262 = sbr.rel (%p260) target = $region40
        $region39: #{tpu_custom_call.1} parent=11 // pred_region
          _
        $region40: #{tpu_custom_call.1} parent=11 // pred_fallthru
          _
      $region12: #{tpu_custom_call.1} parent=5 // pred_fallthru
        _
      %p263 = scmp.lt.s32.totalorder %s18, 2
      // Predicated region
      $region41: #{tpu_custom_call.1} parent=5 // pred_check
        %p264 = pneg %p263
      $region42: #{tpu_custom_call.1} parent=5 // pred_check_branch
        %266 = sbr.rel (%p264) target = $region44
      $region43: #{tpu_custom_call.1} parent=5 // pred_region
        // Predicated region
        $region45: #{tpu_custom_call.1} parent=43 // pred_check
          %p267 = pneg %p38
        $region46: #{tpu_custom_call.1} parent=43 // pred_check_branch
          %269 = sbr.rel (%p267) target = $region48
        $region47: #{tpu_custom_call.1} parent=43 // pred_region
          %s270 = sand.u32 %s28, 1
          %s271 = sand.u32 %s28, 1
          %s272 = smul.addr %s271, 32
          %s273 = scalar_lea.vmem [#allocation2], %s272
          %s274 = smul.u32 2, %s18
          %s275 = smul.addr %s274, 8
          %s276 = scalar_lea.vmem %s0, %s275
          // Predicated region
          $region49: #{tpu_custom_call.1} parent=47 // pred_check
            _
          $region50: #{tpu_custom_call.1} parent=47 // pred_check_branch
            %278 = sbr.rel (0) target = $region52
          $region51: #{tpu_custom_call.1} parent=47 // pred_region
            // Predicated region
            $region53: #{tpu_custom_call.1} parent=51 // pred_check
              _
            $region54: #{tpu_custom_call.1} parent=51 // pred_check_branch
              %280 = sbr.rel (0) target = $region56
            $region55: #{tpu_custom_call.1} parent=51 // pred_region
              loop: start=0, step=1, limit=1
              $region57: #{tpu_custom_call.1} parent=55 // loop_pre_header
                _
              $region58: #{tpu_custom_call.1} parent=55 // loop_header
                %s282 = sphi 0, %s286
                %p283 = scmp.ge.s32.totalorder %s282, 1
                %s287 = sphi %s276, %s276
                %s288 = sphi %s273, %s273
              $region59: #{tpu_custom_call.1} parent=55 // loop_header_branch
                %285 = sbr.rel (%p283) target = $region63
              $region60: #{tpu_custom_call.1} parent=55 // loop_body
                %v289 = vld [vmem:[%s287] sm:$0xff]
                %290 = vst [vmem:[%s288] sm:$0xff] %v289
                %v291 = vld [vmem:[%s287 + $0x8] sm:$0xff]
                %292 = vst [vmem:[%s288 + $0x8] sm:$0xff] %v291
                %v293 = vld [vmem:[%s287 + $0x20] sm:$0xff]
                %294 = vst [vmem:[%s288 + $0x10] sm:$0xff] %v293
                %v295 = vld [vmem:[%s287 + $0x28] sm:$0xff]
                %296 = vst [vmem:[%s288 + $0x18] sm:$0xff] %v295
              $region61: #{tpu_custom_call.1} parent=55 // loop_footer
                %s286 = sadd.s32 1, %s282
              $region62: #{tpu_custom_call.1} parent=55 // loop_footer_branch
                %281 = sbr.rel target = $region58
              $region63: #{tpu_custom_call.1} parent=55 // loop_exit
                _
            $region56: #{tpu_custom_call.1} parent=51 // pred_fallthru
              _
            // Predicated region
            $region64: #{tpu_custom_call.1} parent=51 // pred_check
              _
            $region65: #{tpu_custom_call.1} parent=51 // pred_check_branch
              %298 = sbr.rel target = $region67
            $region66: #{tpu_custom_call.1} parent=51 // pred_region
              _
            $region67: #{tpu_custom_call.1} parent=51 // pred_fallthru
              _
          $region52: #{tpu_custom_call.1} parent=47 // pred_fallthru
            _
          %299 = vnop
        $region48: #{tpu_custom_call.1} parent=43 // pred_fallthru
          _
      $region44: #{tpu_custom_call.1} parent=5 // pred_fallthru
        _
      %p300 = scmp.le.s32.totalorder 1, %s18
      %p301 = scmp.lt.s32.totalorder %s18, 3
      %p302 = pnand %p300, %p301
      %p303 = pneg %p302
      // Predicated region
      $region68: #{tpu_custom_call.1} parent=5 // pred_check
        _
      $region69: #{tpu_custom_call.1} parent=5 // pred_check_branch
        %305 = sbr.rel (%p302) target = $region71
      $region70: #{tpu_custom_call.1} parent=5 // pred_region
        %s306 = ssub.s32 %s18, 1
        %s307 = sand.u32 %s31, 1
        %s308 = sand.u32 %s31, 1
        %s309 = smul.addr %s308, 32
        %s310 = scalar_lea.vmem [#allocation2], %s309
        // Predicated region
        $region72: #{tpu_custom_call.1} parent=70 // pred_check
          %p311 = pneg %p44
        $region73: #{tpu_custom_call.1} parent=70 // pred_check_branch
          %313 = sbr.rel (%p311) target = $region75
        $region74: #{tpu_custom_call.1} parent=70 // pred_region
          _
        $region75: #{tpu_custom_call.1} parent=70 // pred_fallthru
          _
        // Predicated region
        $region76: #{tpu_custom_call.1} parent=70 // pred_check
          %p314 = pneg %p170
        $region77: #{tpu_custom_call.1} parent=70 // pred_check_branch
          %316 = sbr.rel (%p314) target = $region79
        $region78: #{tpu_custom_call.1} parent=70 // pred_region
          %317 = dma.done [#allocation4], 13824
        $region79: #{tpu_custom_call.1} parent=70 // pred_fallthru
          _
        %s318 = sand.u32 %s31, 1
        %s319 = sand.u32 %s31, 1
        %s320 = smul.addr %s319, 32
        %s321 = scalar_lea.vmem [#allocation2], %s320
        %p322 = pneg %p44
        %p323 = pneg %p41
        %p324 = pneg %p65
        %p325 = pneg %p62
        %p326 = pneg %p86
        %p327 = pneg %p83
        %p328 = pneg %p107
        %p329 = pneg %p104
        %p330 = pneg %p128
        %p331 = pneg %p125
        %p332 = pneg %p149
        %p333 = pneg %p146
        %p334 = pneg %p170
        %p335 = pneg %p167
        %p336 = pneg %p191
        %p337 = pneg %p188
        %p338 = pneg %p217
        %p339 = pneg %p214
        %s340 = sand.u32 %s204, 1
        %s341 = scalar_lea.sflag [#allocation5], %s340
        %s342 = sand.u32 %s204, 1
        %s343 = smul.addr %s342, 32
        %s344 = scalar_lea.vmem [#allocation6], %s343
        %s345 = smul.u32 2, %s23
        %s346 = smul.u32 2, %s23
        %v347 = vld [vmem:[%s310] sm:$0xff]
        %v348 = vld [vmem:[%s310 + $0x8] sm:$0xff]
        %v349 = vld [vmem:[%s310 + $0x10] sm:$0xff]
        %v350 = vld [vmem:[%s310 + $0x18] sm:$0xff]
        %v351 = vmul.f32 %v347, %v347
        %v352 = vmul.f32 %v348, %v348
        %v353 = vmul.f32 %v349, %v349
        %v354 = vmul.f32 %v350, %v350
        %v355 = vld [vmem:[%s3] sm:$0xff]
        %v356 = vld [vmem:[%s3 + $0x8] sm:$0xff]
        %v357 = vld [vmem:[%s3 + $0x10] sm:$0xff]
        %v358 = vld [vmem:[%s3 + $0x18] sm:$0xff]
        %v359 = vld [vmem:[%s3 + $0x20] sm:$0xff]
        %v360 = vld [vmem:[%s3 + $0x28] sm:$0xff]
        %v361 = vld [vmem:[%s3 + $0x30] sm:$0xff]
        %v362 = vld [vmem:[%s3 + $0x38] sm:$0xff]
        %v363 = vld [vmem:[%s3 + $0x40] sm:$0xff]
        %v364 = vld [vmem:[%s3 + $0x48] sm:$0xff]
        %v365 = vld [vmem:[%s3 + $0x50] sm:$0xff]
        %v366 = vld [vmem:[%s3 + $0x58] sm:$0xff]
        %v367 = vld [vmem:[%s3 + $0x60] sm:$0xff]
        %v368 = vld [vmem:[%s3 + $0x68] sm:$0xff]
        %v369 = vld [vmem:[%s3 + $0x70] sm:$0xff]
        %v370 = vld [vmem:[%s3 + $0x78] sm:$0xff]
        %v371 = vld [vmem:[%s3 + $0x80] sm:$0xff]
        %v372 = vld [vmem:[%s3 + $0x88] sm:$0xff]
        %v373 = vld [vmem:[%s3 + $0x90] sm:$0xff]
        %v374 = vld [vmem:[%s3 + $0x98] sm:$0xff]
        %v375 = vld [vmem:[%s3 + $0xa0] sm:$0xff]
        %v376 = vld [vmem:[%s3 + $0xa8] sm:$0xff]
        %v377 = vld [vmem:[%s3 + $0xb0] sm:$0xff]
        %v378 = vld [vmem:[%s3 + $0xb8] sm:$0xff]
        %v379 = vld [vmem:[%s3 + $0xc0] sm:$0xff]
        %v380 = vld [vmem:[%s3 + $0xc8] sm:$0xff]
        %v381 = vld [vmem:[%s3 + $0xd0] sm:$0xff]
        %v382 = vld [vmem:[%s3 + $0xd8] sm:$0xff]
        %v383 = vld [vmem:[%s3 + $0xe0] sm:$0xff]
        %v384 = vld [vmem:[%s3 + $0xe8] sm:$0xff]
        %v385 = vld [vmem:[%s3 + $0xf0] sm:$0xff]
        %v386 = vld [vmem:[%s3 + $0xf8] sm:$0xff]
        %387 = vmatprep.subr.mxu0 0.0
        %388 = vmatpush1.msra.mxu0 %v355
        %389 = vmatprep.subr.mxu0 0.0
        %390 = vmatpush1.msra.mxu0 %v356
        %391 = vmatprep.subr.mxu0 0.0
        %392 = vmatpush1.msra.mxu0 %v357
        %393 = vmatprep.subr.mxu0 0.0
        %394 = vmatpush1.msra.mxu0 %v358
        %395 = vmatprep.subr.mxu0 0.0
        %396 = vmatpush1.msra.mxu0 %v359
        %397 = vmatprep.subr.mxu0 0.0
        %398 = vmatpush1.msra.mxu0 %v360
        %399 = vmatprep.subr.mxu0 0.0
        %400 = vmatpush1.msra.mxu0 %v361
        %401 = vmatprep.subr.mxu0 0.0
        %402 = vmatpush1.msra.mxu0 %v362
        %403 = vmatprep.subr.mxu0 0.0
        %404 = vmatpush1.msra.mxu0 %v363
        %405 = vmatprep.subr.mxu0 0.0
        %406 = vmatpush1.msra.mxu0 %v364
        %407 = vmatprep.subr.mxu0 0.0
        %408 = vmatpush1.msra.mxu0 %v365
        %409 = vmatprep.subr.mxu0 0.0
        %410 = vmatpush1.msra.mxu0 %v366
        %411 = vmatprep.subr.mxu0 0.0
        %412 = vmatpush1.msra.mxu0 %v367
        %413 = vmatprep.subr.mxu0 0.0
        %414 = vmatpush1.msra.mxu0 %v368
        %415 = vmatprep.subr.mxu0 0.0
        %416 = vmatpush1.msra.mxu0 %v369
        %417 = vmatprep.subr.mxu0 0.0
        %418 = vmatpush1.msra.mxu0 %v370
        %419 = vmatprep.subr.mxu0 0.0
        %420 = vmatpush1.msra.mxu0 %v371
        %421 = vmatprep.subr.mxu0 0.0
        %422 = vmatpush1.msra.mxu0 %v372
        %423 = vmatprep.subr.mxu0 0.0
        %424 = vmatpush1.msra.mxu0 %v373
        %425 = vmatprep.subr.mxu0 0.0
        %426 = vmatpush1.msra.mxu0 %v374
        %427 = vmatprep.subr.mxu0 0.0
        %428 = vmatpush1.msra.mxu0 %v375
        %429 = vmatprep.subr.mxu0 0.0
        %430 = vmatpush1.msra.mxu0 %v376
        %431 = vmatprep.subr.mxu0 0.0
        %432 = vmatpush1.msra.mxu0 %v377
        %433 = vmatprep.subr.mxu0 0.0
        %434 = vmatpush1.msra.mxu0 %v378
        %435 = vmatprep.subr.mxu0 0.0
        %436 = vmatpush1.msra.mxu0 %v379
        %437 = vmatprep.subr.mxu0 0.0
        %438 = vmatpush1.msra.mxu0 %v380
        %439 = vmatprep.subr.mxu0 0.0
        %440 = vmatpush1.msra.mxu0 %v381
        %441 = vmatprep.subr.mxu0 0.0
        %442 = vmatpush1.msra.mxu0 %v382
        %443 = vmatprep.subr.mxu0 0.0
        %444 = vmatpush1.msra.mxu0 %v383
        %445 = vmatprep.subr.mxu0 0.0
        %446 = vmatpush1.msra.mxu0 %v384
        %447 = vmatprep.subr.mxu0 0.0
        %448 = vmatpush1.msra.mxu0 %v385
        %449 = vmatprep.subr.mxu0 0.0
        %450 = vmatpush1.msra.mxu0 %v386
        %451 = vmatprep.mubr.f32.mxu0 %v348
        %452 = vmatmul.mubr.f32.gmra.mrb[0].mxu0 %v347
        %v453 = vpop.f32.mrb[0].mxu0
        %v454 = vadd.f32 0.0, %v453
        %v455 = vpop.f32.mrb[0].mxu0
        %456 = vmatprep.mubr.f32.mxu0 %v350
        %457 = vmatmul.mubr.f32.gmra.mrb[0].mxu0 %v349
        %v458 = vpop.f32.mrb[0].mxu0
        %v459 = vadd.f32 0.0, %v458
        %v460 = vpop.f32.mrb[0].mxu0
        %461 = vmatprep.mubr.f32.mxu0 %v352
        %462 = vmatmul.mubr.f32.gmra.mrb[0].mxu0 %v351
        %v463 = vpop.f32.mrb[0].mxu0
        %v464 = vadd.f32 0.0, %v463
        %v465 = vpop.f32.mrb[0].mxu0
        %466 = vmatprep.mubr.f32.mxu0 %v354
        %467 = vmatmul.mubr.f32.gmra.mrb[0].mxu0 %v353
        %v468 = vpop.f32.mrb[0].mxu0
        %v469 = vadd.f32 0.0, %v468
        %v470 = vpop.f32.mrb[0].mxu0
        %471 = vdwg.mxu0
        %v472 = vmul.f32 %v454, %v454
        %v473 = vmul.f32 %v459, %v459
        %v474 = vsub.f32 %v464, %v472
        %v475 = vsub.f32 %v469, %v473
        %v476 = vadd.f32 %v474, 1e-06
        %v477 = vadd.f32 %v475, 1e-06
        %v478 = vrsqrt.pop %v476
        %v479 = vrsqrt.pop %v477
        %v480 = vld [vmem:[%s4] sm:$0xff]
        %v481 = vld [vmem:[%s4 + $0x8] sm:$0xff]
        %v482 = vld [vmem:[%s4 + $0x10] sm:$0xff]
        %v483 = vld [vmem:[%s4 + $0x18] sm:$0xff]
        %vm484 = vcmask 130048
        %v486 = vsel %vm484, %v454, 0
        %v489 = vsel %vm484, %v459, 0
        %v492 = vsel %vm484, %v478, 0
        %v495 = vsel %vm484, %v479, 0
        %497 = vmatprep.subr.mxu0 %v481
        %498 = vmatpush1.msra.mxu0 %v480
        %499 = vmatprep.subr.mxu0 %v483
        %500 = vmatpush1.msra.mxu0 %v482
        %501 = vmatprep.subr.mxu0 0.0
        %502 = vmatpush1.msra.mxu0 0.0
        %503 = vmatprep.subr.mxu0 0.0
        %504 = vmatpush1.msra.mxu0 0.0
        %505 = vmatprep.subr.mxu0 0.0
        %506 = vmatpush1.msra.mxu0 0.0
        %507 = vmatprep.subr.mxu0 0.0
        %508 = vmatpush1.msra.mxu0 0.0
        %509 = vmatprep.subr.mxu0 0.0
        %510 = vmatpush1.msra.mxu0 0.0
        %511 = vmatprep.subr.mxu0 0.0
        %512 = vmatpush1.msra.mxu0 0.0
        %513 = vmatprep.subr.mxu0 0.0
        %514 = vmatpush1.msra.mxu0 0.0
        %515 = vmatprep.subr.mxu0 0.0
        %516 = vmatpush1.msra.mxu0 0.0
        %517 = vmatprep.subr.mxu0 0.0
        %518 = vmatpush1.msra.mxu0 0.0
        %519 = vmatprep.subr.mxu0 0.0
        %520 = vmatpush1.msra.mxu0 0.0
        %521 = vmatprep.subr.mxu0 0.0
        %522 = vmatpush1.msra.mxu0 0.0
        %523 = vmatprep.subr.mxu0 0.0
        %524 = vmatpush1.msra.mxu0 0.0
        %525 = vmatprep.subr.mxu0 0.0
        %526 = vmatpush1.msra.mxu0 0.0
        %527 = vmatprep.subr.mxu0 0.0
        %528 = vmatpush1.msra.mxu0 0.0
        %529 = vmatprep.subr.mxu0 0.0
        %530 = vmatpush1.msra.mxu0 0.0
        %531 = vmatprep.subr.mxu0 0.0
        %532 = vmatpush1.msra.mxu0 0.0
        %533 = vmatprep.subr.mxu0 0.0
        %534 = vmatpush1.msra.mxu0 0.0
        %535 = vmatprep.subr.mxu0 0.0
        %536 = vmatpush1.msra.mxu0 0.0
        %537 = vmatprep.subr.mxu0 0.0
        %538 = vmatpush1.msra.mxu0 0.0
        %539 = vmatprep.subr.mxu0 0.0
        %540 = vmatpush1.msra.mxu0 0.0
        %541 = vmatprep.subr.mxu0 0.0
        %542 = vmatpush1.msra.mxu0 0.0
        %543 = vmatprep.subr.mxu0 0.0
        %544 = vmatpush1.msra.mxu0 0.0
        %545 = vmatprep.subr.mxu0 0.0
        %546 = vmatpush1.msra.mxu0 0.0
        %547 = vmatprep.subr.mxu0 0.0
        %548 = vmatpush1.msra.mxu0 0.0
        %549 = vmatprep.subr.mxu0 0.0
        %550 = vmatpush1.msra.mxu0 0.0
        %551 = vmatprep.subr.mxu0 0.0
        %552 = vmatpush1.msra.mxu0 0.0
        %553 = vmatprep.subr.mxu0 0.0
        %554 = vmatpush1.msra.mxu0 0.0
        %555 = vmatprep.subr.mxu0 0.0
        %556 = vmatpush1.msra.mxu0 0.0
        %557 = vmatprep.subr.mxu0 0.0
        %558 = vmatpush1.msra.mxu0 0.0
        %559 = vmatprep.subr.mxu0 0.0
        %560 = vmatpush1.msra.mxu0 0.0
        %561 = vmatprep.mubr.f32.mxu0 0.0
        %562 = vmatmul.mubr.f32.gmra.mrb[0].mxu0 %v486
        %v563 = vpop.f32.mrb[0].mxu0
        %v564 = vadd.f32 0.0, %v563
        %v565 = vpop.f32.mrb[0].mxu0
        %v566 = vadd.f32 0.0, %v565
        %567 = vmatprep.mubr.f32.mxu0 0.0
        %568 = vmatmul.mubr.f32.gmra.mrb[0].mxu0 %v489
        %v569 = vpop.f32.mrb[0].mxu0
        %v570 = vadd.f32 0.0, %v569
        %v571 = vpop.f32.mrb[0].mxu0
        %v572 = vadd.f32 0.0, %v571
        %573 = vmatprep.mubr.f32.mxu0 0.0
        %574 = vmatmul.mubr.f32.gmra.mrb[0].mxu0 %v492
        %v575 = vpop.f32.mrb[0].mxu0
        %v576 = vadd.f32 0.0, %v575
        %v577 = vpop.f32.mrb[0].mxu0
        %v578 = vadd.f32 0.0, %v577
        %579 = vmatprep.mubr.f32.mxu0 0.0
        %580 = vmatmul.mubr.f32.gmra.mrb[0].mxu0 %v495
        %v581 = vpop.f32.mrb[0].mxu0
        %v582 = vadd.f32 0.0, %v581
        %v583 = vpop.f32.mrb[0].mxu0
        %v584 = vadd.f32 0.0, %v583
        %585 = vdwg.mxu0
        %v586 = vsub.f32 %v347, %v564
        %v587 = vsub.f32 %v348, %v566
        %v588 = vsub.f32 %v349, %v570
        %v589 = vsub.f32 %v350, %v572
        %v590 = vmul.f32 %v586, %v576
        %v591 = vmul.f32 %v587, %v578
        %v592 = vmul.f32 %v588, %v582
        %v593 = vmul.f32 %v589, %v584
        %v594 = vld [vmem:[%s1] sm:$0x3]
        %v596 = vlaneseq
        %v597 = vshrl.u32 %v596, 7
        %v598 = vsub.s32 0, %v597
        %v599 = vrot.slane %v594, %v598
        %v600 = vlaneseq
        %v601 = vshrl.u32 %v600, 7
        %v602 = vsub.s32 1, %v601
        %v603 = vrot.slane %v594, %v602
        %v606 = vmul.f32 %v590, %v599
        %v607 = vmul.f32 %v591, %v603
        %v608 = vmul.f32 %v592, %v599
        %v609 = vmul.f32 %v593, %v603
        %v610 = vld [vmem:[%s2] sm:$0x3]
        %v612 = vlaneseq
        %v613 = vshrl.u32 %v612, 7
        %v614 = vsub.s32 0, %v613
        %v615 = vrot.slane %v610, %v614
        %v616 = vlaneseq
        %v617 = vshrl.u32 %v616, 7
        %v618 = vsub.s32 1, %v617
        %v619 = vrot.slane %v610, %v618
        %v622 = vadd.f32 %v606, %v615
        %v623 = vadd.f32 %v607, %v619
        %v624 = vadd.f32 %v608, %v615
        %v625 = vadd.f32 %v609, %v619
        %v626 = vld [vmem:[%s5] sm:$0xff]
        %v627 = vld [vmem:[%s5 + $0x8] sm:$0xff]
        %v628 = vld [vmem:[%s5 + $0x10] sm:$0xff]
        %v629 = vld [vmem:[%s5 + $0x18] sm:$0xff]
        %v630 = vld [vmem:[%s5 + $0x20] sm:$0xff]
        %v631 = vld [vmem:[%s5 + $0x28] sm:$0x3]
        %v633 = vsel %vm484, %v626, 0
        %v636 = vsel %vm484, %v627, 0
        %v639 = vsel %vm484, %v628, 0
        %v642 = vsel %vm484, %v629, 0
        %v645 = vsel %vm484, %v630, 0
        %v648 = vsel %vm484, %v631, 0
        %650 = vmatprep.subr.mxu0 %v623
        %651 = vmatpush1.msra.mxu0 %v622
        %652 = vmatprep.subr.mxu0 %v625
        %653 = vmatpush1.msra.mxu0 %v624
        %654 = vmatprep.subr.mxu0 0.0
        %655 = vmatpush1.msra.mxu0 0.0
        %656 = vmatprep.subr.mxu0 0.0
        %657 = vmatpush1.msra.mxu0 0.0
        %658 = vmatprep.subr.mxu0 0.0
        %659 = vmatpush1.msra.mxu0 0.0
        %660 = vmatprep.subr.mxu0 0.0
        %661 = vmatpush1.msra.mxu0 0.0
        %662 = vmatprep.subr.mxu0 0.0
        %663 = vmatpush1.msra.mxu0 0.0
        %664 = vmatprep.subr.mxu0 0.0
        %665 = vmatpush1.msra.mxu0 0.0
        %666 = vmatprep.subr.mxu0 0.0
        %667 = vmatpush1.msra.mxu0 0.0
        %668 = vmatprep.subr.mxu0 0.0
        %669 = vmatpush1.msra.mxu0 0.0
        %670 = vmatprep.subr.mxu0 0.0
        %671 = vmatpush1.msra.mxu0 0.0
        %672 = vmatprep.subr.mxu0 0.0
        %673 = vmatpush1.msra.mxu0 0.0
        %674 = vmatprep.subr.mxu0 0.0
        %675 = vmatpush1.msra.mxu0 0.0
        %676 = vmatprep.subr.mxu0 0.0
        %677 = vmatpush1.msra.mxu0 0.0
        %678 = vmatprep.subr.mxu0 0.0
        %679 = vmatpush1.msra.mxu0 0.0
        %680 = vmatprep.subr.mxu0 0.0
        %681 = vmatpush1.msra.mxu0 0.0
        %682 = vmatprep.subr.mxu0 0.0
        %683 = vmatpush1.msra.mxu0 0.0
        %684 = vmatprep.subr.mxu0 0.0
        %685 = vmatpush1.msra.mxu0 0.0
        %686 = vmatprep.subr.mxu0 0.0
        %687 = vmatpush1.msra.mxu0 0.0
        %688 = vmatprep.subr.mxu0 0.0
        %689 = vmatpush1.msra.mxu0 0.0
        %690 = vmatprep.subr.mxu0 0.0
        %691 = vmatpush1.msra.mxu0 0.0
        %692 = vmatprep.subr.mxu0 0.0
        %693 = vmatpush1.msra.mxu0 0.0
        %694 = vmatprep.subr.mxu0 0.0
        %695 = vmatpush1.msra.mxu0 0.0
        %696 = vmatprep.subr.mxu0 0.0
        %697 = vmatpush1.msra.mxu0 0.0
        %698 = vmatprep.subr.mxu0 0.0
        %699 = vmatpush1.msra.mxu0 0.0
        %700 = vmatprep.subr.mxu0 0.0
        %701 = vmatpush1.msra.mxu0 0.0
        %702 = vmatprep.subr.mxu0 0.0
        %703 = vmatpush1.msra.mxu0 0.0
        %704 = vmatprep.subr.mxu0 0.0
        %705 = vmatpush1.msra.mxu0 0.0
        %706 = vmatprep.subr.mxu0 0.0
        %707 = vmatpush1.msra.mxu0 0.0
        %708 = vmatprep.subr.mxu0 0.0
        %709 = vmatpush1.msra.mxu0 0.0
        %710 = vmatprep.subr.mxu0 0.0
        %711 = vmatpush1.msra.mxu0 0.0
        %712 = vmatprep.subr.mxu0 0.0
        %713 = vmatpush1.msra.mxu0 0.0
        %714 = vmatprep.mubr.f32.mxu0 0.0
        %715 = vmatmul.mubr.f32.gmra.mrb[0].mxu0 %v633
        %v716 = vpop.f32.mrb[0].mxu0
        %v717 = vadd.f32 0.0, %v716
        %v718 = vpop.f32.mrb[0].mxu0
        %v719 = vadd.f32 0.0, %v718
        %720 = vmatprep.mubr.f32.mxu0 0.0
        %721 = vmatmul.mubr.f32.gmra.mrb[0].mxu0 %v636
        %v722 = vpop.f32.mrb[0].mxu0
        %v723 = vadd.f32 0.0, %v722
        %v724 = vpop.f32.mrb[0].mxu0
        %v725 = vadd.f32 0.0, %v724
        %726 = vmatprep.mubr.f32.mxu0 0.0
        %727 = vmatmul.mubr.f32.gmra.mrb[0].mxu0 %v639
        %v728 = vpop.f32.mrb[0].mxu0
        %v729 = vadd.f32 0.0, %v728
        %v730 = vpop.f32.mrb[0].mxu0
        %v731 = vadd.f32 0.0, %v730
        %732 = vmatprep.mubr.f32.mxu0 0.0
        %733 = vmatmul.mubr.f32.gmra.mrb[0].mxu0 %v642
        %v734 = vpop.f32.mrb[0].mxu0
        %v735 = vadd.f32 0.0, %v734
        %v736 = vpop.f32.mrb[0].mxu0
        %v737 = vadd.f32 0.0, %v736
        %738 = vmatprep.mubr.f32.mxu0 0.0
        %739 = vmatmul.mubr.f32.gmra.mrb[0].mxu0 %v645
        %v740 = vpop.f32.mrb[0].mxu0
        %v741 = vadd.f32 0.0, %v740
        %v742 = vpop.f32.mrb[0].mxu0
        %v743 = vadd.f32 0.0, %v742
        %744 = vmatprep.mubr.f32.mxu0 0.0
        %745 = vmatmul.mubr.f32.gmra.mrb[0].mxu0 %v648
        %v746 = vpop.f32.mrb[0].mxu0
        %v747 = vadd.f32 0.0, %v746
        %v748 = vpop.f32.mrb[0].mxu0
        %v749 = vadd.f32 0.0, %v748
        %750 = vdwg.mxu0
        %751 = vrot.lane.b32.xlu0 %v717, 1
        %v752 = vpop.permute.xlu0 %751
        %753 = vrot.lane.b32.xlu0 %v723, 1
        %v754 = vpop.permute.xlu0 %753
        %755 = vrot.lane.b32.xlu0 %v729, 1
        %v756 = vpop.permute.xlu0 %755
        %757 = vrot.lane.b32.xlu0 %v735, 1
        %v758 = vpop.permute.xlu0 %757
        %759 = vrot.lane.b32.xlu0 %v741, 1
        %v760 = vpop.permute.xlu0 %759
        %761 = vrot.lane.b32.xlu0 %v747, 1
        %v762 = vpop.permute.xlu0 %761
        %763 = vrot.lane.b32.xlu0 %v719, 1
        %v764 = vpop.permute.xlu0 %763
        %765 = vrot.lane.b32.xlu0 %v725, 1
        %v766 = vpop.permute.xlu0 %765
        %767 = vrot.lane.b32.xlu0 %v731, 1
        %v768 = vpop.permute.xlu0 %767
        %769 = vrot.lane.b32.xlu0 %v737, 1
        %v770 = vpop.permute.xlu0 %769
        %771 = vrot.lane.b32.xlu0 %v743, 1
        %v772 = vpop.permute.xlu0 %771
        %773 = vrot.lane.b32.xlu0 %v749, 1
        %v774 = vpop.permute.xlu0 %773
        %v775 = vlaneseq
        %v776 = vand.u32 %v775, 127
        %vm777 = vcmp.lt.s32.totalorder %v776, 1
        %v778 = vsel %vm777, %v752, %v764
        %v779 = vsel %vm777, %v754, %v766
        %v780 = vsel %vm777, %v756, %v768
        %v781 = vsel %vm777, %v758, %v770
        %v782 = vsel %vm777, %v760, %v772
        %v783 = vsel %vm777, %v762, %v774
        %v784 = vsel %vm777, %v764, %v752
        %v785 = vsel %vm777, %v766, %v754
        %v786 = vsel %vm777, %v768, %v756
        %v787 = vsel %vm777, %v770, %v758
        %v788 = vsel %vm777, %v772, %v760
        %v789 = vsel %vm777, %v774, %v762
        %790 = vrot.lane.b32.xlu0 %v717, 127
        %v791 = vpop.permute.xlu0 %790
        %792 = vrot.lane.b32.xlu0 %v723, 127
        %v793 = vpop.permute.xlu0 %792
        %794 = vrot.lane.b32.xlu0 %v729, 127
        %v795 = vpop.permute.xlu0 %794
        %796 = vrot.lane.b32.xlu0 %v735, 127
        %v797 = vpop.permute.xlu0 %796
        %798 = vrot.lane.b32.xlu0 %v741, 127
        %v799 = vpop.permute.xlu0 %798
        %800 = vrot.lane.b32.xlu0 %v747, 127
        %v801 = vpop.permute.xlu0 %800
        %802 = vrot.lane.b32.xlu0 %v719, 127
        %v803 = vpop.permute.xlu0 %802
        %804 = vrot.lane.b32.xlu0 %v725, 127
        %v805 = vpop.permute.xlu0 %804
        %806 = vrot.lane.b32.xlu0 %v731, 127
        %v807 = vpop.permute.xlu0 %806
        %808 = vrot.lane.b32.xlu0 %v737, 127
        %v809 = vpop.permute.xlu0 %808
        %810 = vrot.lane.b32.xlu0 %v743, 127
        %v811 = vpop.permute.xlu0 %810
        %812 = vrot.lane.b32.xlu0 %v749, 127
        %v813 = vpop.permute.xlu0 %812
        %vm814 = vcmp.lt.s32.totalorder %v776, 127
        %v815 = vsel %vm814, %v791, %v803
        %v816 = vsel %vm814, %v793, %v805
        %v817 = vsel %vm814, %v795, %v807
        %v818 = vsel %vm814, %v797, %v809
        %v819 = vsel %vm814, %v799, %v811
        %v820 = vsel %vm814, %v801, %v813
        %v821 = vsel %vm814, %v803, %v791
        %v822 = vsel %vm814, %v805, %v793
        %v823 = vsel %vm814, %v807, %v795
        %v824 = vsel %vm814, %v809, %v797
        %v825 = vsel %vm814, %v811, %v799
        %v826 = vsel %vm814, %v813, %v801
        %s827 = scalar_lea.vmem [#allocation3], 288
        %v828 = vld [vmem:[%s827] sm:$0xff]
        %v829 = vld [vmem:[%s827 + $0x8] sm:$0xff]
        %v830 = vld [vmem:[%s827 + $0x10] sm:$0xff]
        %v831 = vld [vmem:[%s827 + $0x18] sm:$0xff]
        %v832 = vld [vmem:[%s827 + $0x20] sm:$0xff]
        %v833 = vld [vmem:[%s827 + $0x28] sm:$0xff]
        %v834 = vld [vmem:[%s827 + $0x30] sm:$0xff]
        %v835 = vld [vmem:[%s827 + $0x38] sm:$0xff]
        %v836 = vld [vmem:[%s827 + $0x40] sm:$0xff]
        %v837 = vld [vmem:[%s827 + $0x48] sm:$0xff]
        %v838 = vld [vmem:[%s827 + $0x50] sm:$0x3]
        %v839 = vld [vmem:[%s827 + $0x58] sm:$0x3]
        %v840 = vmul.f32 %v828, %v784
        %v841 = vmul.f32 %v829, %v778
        %v842 = vmul.f32 %v830, %v785
        %v843 = vmul.f32 %v831, %v779
        %v844 = vmul.f32 %v832, %v786
        %v845 = vmul.f32 %v833, %v780
        %v846 = vmul.f32 %v834, %v787
        %v847 = vmul.f32 %v835, %v781
        %v848 = vmul.f32 %v836, %v788
        %v849 = vmul.f32 %v837, %v782
        %v850 = vmul.f32 %v838, %v789
        %v851 = vmul.f32 %v839, %v783
        %s852 = scalar_lea.vmem [#allocation3], 384
        %v853 = vld [vmem:[%s852] sm:$0xff]
        %v854 = vld [vmem:[%s852 + $0x8] sm:$0xff]
        %v855 = vld [vmem:[%s852 + $0x10] sm:$0xff]
        %v856 = vld [vmem:[%s852 + $0x18] sm:$0xff]
        %v857 = vld [vmem:[%s852 + $0x20] sm:$0xff]
        %v858 = vld [vmem:[%s852 + $0x28] sm:$0xff]
        %v859 = vld [vmem:[%s852 + $0x30] sm:$0xff]
        %v860 = vld [vmem:[%s852 + $0x38] sm:$0xff]
        %v861 = vld [vmem:[%s852 + $0x40] sm:$0xff]
        %v862 = vld [vmem:[%s852 + $0x48] sm:$0xff]
        %v863 = vld [vmem:[%s852 + $0x50] sm:$0x3]
        %v864 = vld [vmem:[%s852 + $0x58] sm:$0x3]
        %v865 = vmul.f32 %v853, %v717
        %v866 = vmul.f32 %v854, %v719
        %v867 = vmul.f32 %v855, %v723
        %v868 = vmul.f32 %v856, %v725
        %v869 = vmul.f32 %v857, %v729
        %v870 = vmul.f32 %v858, %v731
        %v871 = vmul.f32 %v859, %v735
        %v872 = vmul.f32 %v860, %v737
        %v873 = vmul.f32 %v861, %v741
        %v874 = vmul.f32 %v862, %v743
        %v875 = vmul.f32 %v863, %v747
        %v876 = vmul.f32 %v864, %v749
        %v877 = vadd.f32 %v840, %v865
        %v878 = vadd.f32 %v841, %v866
        %v879 = vadd.f32 %v842, %v867
        %v880 = vadd.f32 %v843, %v868
        %v881 = vadd.f32 %v844, %v869
        %v882 = vadd.f32 %v845, %v870
        %v883 = vadd.f32 %v846, %v871
        %v884 = vadd.f32 %v847, %v872
        %v885 = vadd.f32 %v848, %v873
        %v886 = vadd.f32 %v849, %v874
        %v887 = vadd.f32 %v850, %v875
        %v888 = vadd.f32 %v851, %v876
        %s889 = scalar_lea.vmem [#allocation3], 480
        %v890 = vld [vmem:[%s889] sm:$0xff]
        %v891 = vld [vmem:[%s889 + $0x8] sm:$0xff]
        %v892 = vld [vmem:[%s889 + $0x10] sm:$0xff]
        %v893 = vld [vmem:[%s889 + $0x18] sm:$0xff]
        %v894 = vld [vmem:[%s889 + $0x20] sm:$0xff]
        %v895 = vld [vmem:[%s889 + $0x28] sm:$0xff]
        %v896 = vld [vmem:[%s889 + $0x30] sm:$0xff]
        %v897 = vld [vmem:[%s889 + $0x38] sm:$0xff]
        %v898 = vld [vmem:[%s889 + $0x40] sm:$0xff]
        %v899 = vld [vmem:[%s889 + $0x48] sm:$0xff]
        %v900 = vld [vmem:[%s889 + $0x50] sm:$0x3]
        %v901 = vld [vmem:[%s889 + $0x58] sm:$0x3]
        %v902 = vmul.f32 %v890, %v815
        %v903 = vmul.f32 %v891, %v821
        %v904 = vmul.f32 %v892, %v816
        %v905 = vmul.f32 %v893, %v822
        %v906 = vmul.f32 %v894, %v817
        %v907 = vmul.f32 %v895, %v823
        %v908 = vmul.f32 %v896, %v818
        %v909 = vmul.f32 %v897, %v824
        %v910 = vmul.f32 %v898, %v819
        %v911 = vmul.f32 %v899, %v825
        %v912 = vmul.f32 %v900, %v820
        %v913 = vmul.f32 %v901, %v826
        %v914 = vadd.f32 %v877, %v902
        %v915 = vadd.f32 %v878, %v903
        %v916 = vadd.f32 %v879, %v904
        %v917 = vadd.f32 %v880, %v905
        %v918 = vadd.f32 %v881, %v906
        %v919 = vadd.f32 %v882, %v907
        %v920 = vadd.f32 %v883, %v908
        %v921 = vadd.f32 %v884, %v909
        %v922 = vadd.f32 %v885, %v910
        %v923 = vadd.f32 %v886, %v911
        %v924 = vadd.f32 %v887, %v912
        %v925 = vadd.f32 %v888, %v913
        %v926 = vld [vmem:[#allocation3] sm:$0xff]
        %v927 = vld [vmem:[#allocation3 + $0x8] sm:$0xff]
        %v928 = vld [vmem:[#allocation3 + $0x10] sm:$0xff]
        %v929 = vld [vmem:[#allocation3 + $0x18] sm:$0xff]
        %v930 = vld [vmem:[#allocation3 + $0x20] sm:$0xff]
        %v931 = vld [vmem:[#allocation3 + $0x28] sm:$0xff]
        %v932 = vld [vmem:[#allocation3 + $0x30] sm:$0xff]
        %v933 = vld [vmem:[#allocation3 + $0x38] sm:$0xff]
        %v934 = vld [vmem:[#allocation3 + $0x40] sm:$0xff]
        %v935 = vld [vmem:[#allocation3 + $0x48] sm:$0xff]
        %v936 = vld [vmem:[#allocation3 + $0x50] sm:$0x3]
        %v937 = vld [vmem:[#allocation3 + $0x58] sm:$0x3]
        %v938 = vmul.f32 %v926, %v784
        %v939 = vmul.f32 %v927, %v778
        %v940 = vmul.f32 %v928, %v785
        %v941 = vmul.f32 %v929, %v779
        %v942 = vmul.f32 %v930, %v786
        %v943 = vmul.f32 %v931, %v780
        %v944 = vmul.f32 %v932, %v787
        %v945 = vmul.f32 %v933, %v781
        %v946 = vmul.f32 %v934, %v788
        %v947 = vmul.f32 %v935, %v782
        %v948 = vmul.f32 %v936, %v789
        %v949 = vmul.f32 %v937, %v783
        %s950 = scalar_lea.vmem [#allocation3], 96
        %v951 = vld [vmem:[%s950] sm:$0xff]
        %v952 = vld [vmem:[%s950 + $0x8] sm:$0xff]
        %v953 = vld [vmem:[%s950 + $0x10] sm:$0xff]
        %v954 = vld [vmem:[%s950 + $0x18] sm:$0xff]
        %v955 = vld [vmem:[%s950 + $0x20] sm:$0xff]
        %v956 = vld [vmem:[%s950 + $0x28] sm:$0xff]
        %v957 = vld [vmem:[%s950 + $0x30] sm:$0xff]
        %v958 = vld [vmem:[%s950 + $0x38] sm:$0xff]
        %v959 = vld [vmem:[%s950 + $0x40] sm:$0xff]
        %v960 = vld [vmem:[%s950 + $0x48] sm:$0xff]
        %v961 = vld [vmem:[%s950 + $0x50] sm:$0x3]
        %v962 = vld [vmem:[%s950 + $0x58] sm:$0x3]
        %v963 = vmul.f32 %v951, %v717
        %v964 = vmul.f32 %v952, %v719
        %v965 = vmul.f32 %v953, %v723
        %v966 = vmul.f32 %v954, %v725
        %v967 = vmul.f32 %v955, %v729
        %v968 = vmul.f32 %v956, %v731
        %v969 = vmul.f32 %v957, %v735
        %v970 = vmul.f32 %v958, %v737
        %v971 = vmul.f32 %v959, %v741
        %v972 = vmul.f32 %v960, %v743
        %v973 = vmul.f32 %v961, %v747
        %v974 = vmul.f32 %v962, %v749
        %v975 = vadd.f32 %v938, %v963
        %v976 = vadd.f32 %v939, %v964
        %v977 = vadd.f32 %v940, %v965
        %v978 = vadd.f32 %v941, %v966
        %v979 = vadd.f32 %v942, %v967
        %v980 = vadd.f32 %v943, %v968
        %v981 = vadd.f32 %v944, %v969
        %v982 = vadd.f32 %v945, %v970
        %v983 = vadd.f32 %v946, %v971
        %v984 = vadd.f32 %v947, %v972
        %v985 = vadd.f32 %v948, %v973
        %v986 = vadd.f32 %v949, %v974
        %s987 = scalar_lea.vmem [#allocation3], 192
        %v988 = vld [vmem:[%s987] sm:$0xff]
        %v989 = vld [vmem:[%s987 + $0x8] sm:$0xff]
        %v990 = vld [vmem:[%s987 + $0x10] sm:$0xff]
        %v991 = vld [vmem:[%s987 + $0x18] sm:$0xff]
        %v992 = vld [vmem:[%s987 + $0x20] sm:$0xff]
        %v993 = vld [vmem:[%s987 + $0x28] sm:$0xff]
        %v994 = vld [vmem:[%s987 + $0x30] sm:$0xff]
        %v995 = vld [vmem:[%s987 + $0x38] sm:$0xff]
        %v996 = vld [vmem:[%s987 + $0x40] sm:$0xff]
        %v997 = vld [vmem:[%s987 + $0x48] sm:$0xff]
        %v998 = vld [vmem:[%s987 + $0x50] sm:$0x3]
        %v999 = vld [vmem:[%s987 + $0x58] sm:$0x3]
        %v1000 = vmul.f32 %v988, %v815
        %v1001 = vmul.f32 %v989, %v821
        %v1002 = vmul.f32 %v990, %v816
        %v1003 = vmul.f32 %v991, %v822
        %v1004 = vmul.f32 %v992, %v817
        %v1005 = vmul.f32 %v993, %v823
        %v1006 = vmul.f32 %v994, %v818
        %v1007 = vmul.f32 %v995, %v824
        %v1008 = vmul.f32 %v996, %v819
        %v1009 = vmul.f32 %v997, %v825
        %v1010 = vmul.f32 %v998, %v820
        %v1011 = vmul.f32 %v999, %v826
        %v1012 = vadd.f32 %v975, %v1000
        %v1013 = vadd.f32 %v976, %v1001
        %v1014 = vadd.f32 %v977, %v1002
        %v1015 = vadd.f32 %v978, %v1003
        %v1016 = vadd.f32 %v979, %v1004
        %v1017 = vadd.f32 %v980, %v1005
        %v1018 = vadd.f32 %v981, %v1006
        %v1019 = vadd.f32 %v982, %v1007
        %v1020 = vadd.f32 %v983, %v1008
        %v1021 = vadd.f32 %v984, %v1009
        %v1022 = vadd.f32 %v985, %v1010
        %v1023 = vadd.f32 %v986, %v1011
        %1024 = vrot.lane.b32.xlu0 %v1012, 16
        %v1025 = vpop.permute.xlu0 %1024
        %1026 = vrot.lane.b32.xlu0 %v1014, 16
        %v1027 = vpop.permute.xlu0 %1026
        %1028 = vrot.lane.b32.xlu0 %v1016, 16
        %v1029 = vpop.permute.xlu0 %1028
        %1030 = vrot.lane.b32.xlu0 %v1018, 16
        %v1031 = vpop.permute.xlu0 %1030
        %1032 = vrot.lane.b32.xlu0 %v1020, 16
        %v1033 = vpop.permute.xlu0 %1032
        %1034 = vrot.lane.b32.xlu0 %v1022, 16
        %v1035 = vpop.permute.xlu0 %1034
        %1036 = vrot.lane.b32.xlu0 %v1013, 16
        %v1037 = vpop.permute.xlu0 %1036
        %1038 = vrot.lane.b32.xlu0 %v1015, 16
        %v1039 = vpop.permute.xlu0 %1038
        %1040 = vrot.lane.b32.xlu0 %v1017, 16
        %v1041 = vpop.permute.xlu0 %1040
        %1042 = vrot.lane.b32.xlu0 %v1019, 16
        %v1043 = vpop.permute.xlu0 %1042
        %1044 = vrot.lane.b32.xlu0 %v1021, 16
        %v1045 = vpop.permute.xlu0 %1044
        %1046 = vrot.lane.b32.xlu0 %v1023, 16
        %v1047 = vpop.permute.xlu0 %1046
        %vm1048 = vcmp.lt.s32.totalorder %v776, 16
        %v1049 = vsel %vm1048, %v1025, %v1037
        %v1050 = vsel %vm1048, %v1027, %v1039
        %v1051 = vsel %vm1048, %v1029, %v1041
        %v1052 = vsel %vm1048, %v1031, %v1043
        %v1053 = vsel %vm1048, %v1033, %v1045
        %v1054 = vsel %vm1048, %v1035, %v1047
        %v1055 = vsel %vm1048, %v1037, %v1025
        %v1056 = vsel %vm1048, %v1039, %v1027
        %v1057 = vsel %vm1048, %v1041, %v1029
        %v1058 = vsel %vm1048, %v1043, %v1031
        %v1059 = vsel %vm1048, %v1045, %v1033
        %v1060 = vsel %vm1048, %v1047, %v1035
        %v1061 = vadd.f32 %v914, %v1055
        %v1062 = vadd.f32 %v915, %v1049
        %v1063 = vadd.f32 %v916, %v1056
        %v1064 = vadd.f32 %v917, %v1050
        %v1065 = vadd.f32 %v918, %v1057
        %v1066 = vadd.f32 %v919, %v1051
        %v1067 = vadd.f32 %v920, %v1058
        %v1068 = vadd.f32 %v921, %v1052
        %v1069 = vadd.f32 %v922, %v1059
        %v1070 = vadd.f32 %v923, %v1053
        %v1071 = vadd.f32 %v924, %v1060
        %v1072 = vadd.f32 %v925, %v1054
        %s1073 = scalar_lea.vmem [#allocation3], 576
        %v1074 = vld [vmem:[%s1073] sm:$0xff]
        %v1075 = vld [vmem:[%s1073 + $0x8] sm:$0xff]
        %v1076 = vld [vmem:[%s1073 + $0x10] sm:$0xff]
        %v1077 = vld [vmem:[%s1073 + $0x18] sm:$0xff]
        %v1078 = vld [vmem:[%s1073 + $0x20] sm:$0xff]
        %v1079 = vld [vmem:[%s1073 + $0x28] sm:$0xff]
        %v1080 = vld [vmem:[%s1073 + $0x30] sm:$0xff]
        %v1081 = vld [vmem:[%s1073 + $0x38] sm:$0xff]
        %v1082 = vld [vmem:[%s1073 + $0x40] sm:$0xff]
        %v1083 = vld [vmem:[%s1073 + $0x48] sm:$0xff]
        %v1084 = vld [vmem:[%s1073 + $0x50] sm:$0x3]
        %v1085 = vld [vmem:[%s1073 + $0x58] sm:$0x3]
        %v1086 = vmul.f32 %v1074, %v784
        %v1087 = vmul.f32 %v1075, %v778
        %v1088 = vmul.f32 %v1076, %v785
        %v1089 = vmul.f32 %v1077, %v779
        %v1090 = vmul.f32 %v1078, %v786
        %v1091 = vmul.f32 %v1079, %v780
        %v1092 = vmul.f32 %v1080, %v787
        %v1093 = vmul.f32 %v1081, %v781
        %v1094 = vmul.f32 %v1082, %v788
        %v1095 = vmul.f32 %v1083, %v782
        %v1096 = vmul.f32 %v1084, %v789
        %v1097 = vmul.f32 %v1085, %v783
        %s1098 = scalar_lea.vmem [#allocation3], 672
        %v1099 = vld [vmem:[%s1098] sm:$0xff]
        %v1100 = vld [vmem:[%s1098 + $0x8] sm:$0xff]
        %v1101 = vld [vmem:[%s1098 + $0x10] sm:$0xff]
        %v1102 = vld [vmem:[%s1098 + $0x18] sm:$0xff]
        %v1103 = vld [vmem:[%s1098 + $0x20] sm:$0xff]
        %v1104 = vld [vmem:[%s1098 + $0x28] sm:$0xff]
        %v1105 = vld [vmem:[%s1098 + $0x30] sm:$0xff]
        %v1106 = vld [vmem:[%s1098 + $0x38] sm:$0xff]
        %v1107 = vld [vmem:[%s1098 + $0x40] sm:$0xff]
        %v1108 = vld [vmem:[%s1098 + $0x48] sm:$0xff]
        %v1109 = vld [vmem:[%s1098 + $0x50] sm:$0x3]
        %v1110 = vld [vmem:[%s1098 + $0x58] sm:$0x3]
        %v1111 = vmul.f32 %v1099, %v717
        %v1112 = vmul.f32 %v1100, %v719
        %v1113 = vmul.f32 %v1101, %v723
        %v1114 = vmul.f32 %v1102, %v725
        %v1115 = vmul.f32 %v1103, %v729
        %v1116 = vmul.f32 %v1104, %v731
        %v1117 = vmul.f32 %v1105, %v735
        %v1118 = vmul.f32 %v1106, %v737
        %v1119 = vmul.f32 %v1107, %v741
        %v1120 = vmul.f32 %v1108, %v743
        %v1121 = vmul.f32 %v1109, %v747
        %v1122 = vmul.f32 %v1110, %v749
        %v1123 = vadd.f32 %v1086, %v1111
        %v1124 = vadd.f32 %v1087, %v1112
        %v1125 = vadd.f32 %v1088, %v1113
        %v1126 = vadd.f32 %v1089, %v1114
        %v1127 = vadd.f32 %v1090, %v1115
        %v1128 = vadd.f32 %v1091, %v1116
        %v1129 = vadd.f32 %v1092, %v1117
        %v1130 = vadd.f32 %v1093, %v1118
        %v1131 = vadd.f32 %v1094, %v1119
        %v1132 = vadd.f32 %v1095, %v1120
        %v1133 = vadd.f32 %v1096, %v1121
        %v1134 = vadd.f32 %v1097, %v1122
        %s1135 = scalar_lea.vmem [#allocation3], 768
        %v1136 = vld [vmem:[%s1135] sm:$0xff]
        %v1137 = vld [vmem:[%s1135 + $0x8] sm:$0xff]
        %v1138 = vld [vmem:[%s1135 + $0x10] sm:$0xff]
        %v1139 = vld [vmem:[%s1135 + $0x18] sm:$0xff]
        %v1140 = vld [vmem:[%s1135 + $0x20] sm:$0xff]
        %v1141 = vld [vmem:[%s1135 + $0x28] sm:$0xff]
        %v1142 = vld [vmem:[%s1135 + $0x30] sm:$0xff]
        %v1143 = vld [vmem:[%s1135 + $0x38] sm:$0xff]
        %v1144 = vld [vmem:[%s1135 + $0x40] sm:$0xff]
        %v1145 = vld [vmem:[%s1135 + $0x48] sm:$0xff]
        %v1146 = vld [vmem:[%s1135 + $0x50] sm:$0x3]
        %v1147 = vld [vmem:[%s1135 + $0x58] sm:$0x3]
        %v1148 = vmul.f32 %v1136, %v815
        %v1149 = vmul.f32 %v1137, %v821
        %v1150 = vmul.f32 %v1138, %v816
        %v1151 = vmul.f32 %v1139, %v822
        %v1152 = vmul.f32 %v1140, %v817
        %v1153 = vmul.f32 %v1141, %v823
        %v1154 = vmul.f32 %v1142, %v818
        %v1155 = vmul.f32 %v1143, %v824
        %v1156 = vmul.f32 %v1144, %v819
        %v1157 = vmul.f32 %v1145, %v825
        %v1158 = vmul.f32 %v1146, %v820
        %v1159 = vmul.f32 %v1147, %v826
        %v1160 = vadd.f32 %v1123, %v1148
        %v1161 = vadd.f32 %v1124, %v1149
        %v1162 = vadd.f32 %v1125, %v1150
        %v1163 = vadd.f32 %v1126, %v1151
        %v1164 = vadd.f32 %v1127, %v1152
        %v1165 = vadd.f32 %v1128, %v1153
        %v1166 = vadd.f32 %v1129, %v1154
        %v1167 = vadd.f32 %v1130, %v1155
        %v1168 = vadd.f32 %v1131, %v1156
        %v1169 = vadd.f32 %v1132, %v1157
        %v1170 = vadd.f32 %v1133, %v1158
        %v1171 = vadd.f32 %v1134, %v1159
        %1172 = vrot.lane.b32.xlu0 %v1160, 112
        %v1173 = vpop.permute.xlu0 %1172
        %1174 = vrot.lane.b32.xlu0 %v1162, 112
        %v1175 = vpop.permute.xlu0 %1174
        %1176 = vrot.lane.b32.xlu0 %v1164, 112
        %v1177 = vpop.permute.xlu0 %1176
        %1178 = vrot.lane.b32.xlu0 %v1166, 112
        %v1179 = vpop.permute.xlu0 %1178
        %1180 = vrot.lane.b32.xlu0 %v1168, 112
        %v1181 = vpop.permute.xlu0 %1180
        %1182 = vrot.lane.b32.xlu0 %v1170, 112
        %v1183 = vpop.permute.xlu0 %1182
        %1184 = vrot.lane.b32.xlu0 %v1161, 112
        %v1185 = vpop.permute.xlu0 %1184
        %1186 = vrot.lane.b32.xlu0 %v1163, 112
        %v1187 = vpop.permute.xlu0 %1186
        %1188 = vrot.lane.b32.xlu0 %v1165, 112
        %v1189 = vpop.permute.xlu0 %1188
        %1190 = vrot.lane.b32.xlu0 %v1167, 112
        %v1191 = vpop.permute.xlu0 %1190
        %1192 = vrot.lane.b32.xlu0 %v1169, 112
        %v1193 = vpop.permute.xlu0 %1192
        %1194 = vrot.lane.b32.xlu0 %v1171, 112
        %v1195 = vpop.permute.xlu0 %1194
        %vm1196 = vcmp.lt.s32.totalorder %v776, 112
        %v1197 = vsel %vm1196, %v1173, %v1185
        %v1198 = vsel %vm1196, %v1175, %v1187
        %v1199 = vsel %vm1196, %v1177, %v1189
        %v1200 = vsel %vm1196, %v1179, %v1191
        %v1201 = vsel %vm1196, %v1181, %v1193
        %v1202 = vsel %vm1196, %v1183, %v1195
        %v1203 = vsel %vm1196, %v1185, %v1173
        %v1204 = vsel %vm1196, %v1187, %v1175
        %v1205 = vsel %vm1196, %v1189, %v1177
        %v1206 = vsel %vm1196, %v1191, %v1179
        %v1207 = vsel %vm1196, %v1193, %v1181
        %v1208 = vsel %vm1196, %v1195, %v1183
        %v1209 = vadd.f32 %v1061, %v1197
        %v1210 = vadd.f32 %v1062, %v1203
        %v1211 = vadd.f32 %v1063, %v1198
        %v1212 = vadd.f32 %v1064, %v1204
        %v1213 = vadd.f32 %v1065, %v1199
        %v1214 = vadd.f32 %v1066, %v1205
        %v1215 = vadd.f32 %v1067, %v1200
        %v1216 = vadd.f32 %v1068, %v1206
        %v1217 = vadd.f32 %v1069, %v1201
        %v1218 = vadd.f32 %v1070, %v1207
        %v1219 = vadd.f32 %v1071, %v1202
        %v1220 = vadd.f32 %v1072, %v1208
        %v1221 = vmul.f32 %v1209, 0.5
        %v1222 = vmul.f32 %v1210, 0.5
        %v1223 = vmul.f32 %v1211, 0.5
        %v1224 = vmul.f32 %v1212, 0.5
        %v1225 = vmul.f32 %v1213, 0.5
        %v1226 = vmul.f32 %v1214, 0.5
        %v1227 = vmul.f32 %v1215, 0.5
        %v1228 = vmul.f32 %v1216, 0.5
        %v1229 = vmul.f32 %v1217, 0.5
        %v1230 = vmul.f32 %v1218, 0.5
        %v1231 = vmul.f32 %v1219, 0.5
        %v1232 = vmul.f32 %v1220, 0.5
        %v1233 = vmul.f32 %v1209, 0.70710677
        %v1234 = vmul.f32 %v1210, 0.70710677
        %v1235 = vmul.f32 %v1211, 0.70710677
        %v1236 = vmul.f32 %v1212, 0.70710677
        %v1237 = vmul.f32 %v1213, 0.70710677
        %v1238 = vmul.f32 %v1214, 0.70710677
        %v1239 = vmul.f32 %v1215, 0.70710677
        %v1240 = vmul.f32 %v1216, 0.70710677
        %v1241 = vmul.f32 %v1217, 0.70710677
        %v1242 = vmul.f32 %v1218, 0.70710677
        %v1243 = vmul.f32 %v1219, 0.70710677
        %v1244 = vmul.f32 %v1220, 0.70710677
        %v1245 = vand.u32 2147483647, %v1233
        %v1246 = vand.u32 2147483647, %v1234
        %v1247 = vand.u32 2147483647, %v1235
        %v1248 = vand.u32 2147483647, %v1236
        %v1249 = vand.u32 2147483647, %v1237
        %v1250 = vand.u32 2147483647, %v1238
        %v1251 = vand.u32 2147483647, %v1239
        %v1252 = vand.u32 2147483647, %v1240
        %v1253 = vand.u32 2147483647, %v1241
        %v1254 = vand.u32 2147483647, %v1242
        %v1255 = vand.u32 2147483647, %v1243
        %v1256 = vand.u32 2147483647, %v1244
        %v1257 = vmul.f32 %v1245, 0.3275911
        %v1258 = vmul.f32 %v1246, 0.3275911
        %v1259 = vmul.f32 %v1247, 0.3275911
        %v1260 = vmul.f32 %v1248, 0.3275911
        %v1261 = vmul.f32 %v1249, 0.3275911
        %v1262 = vmul.f32 %v1250, 0.3275911
        %v1263 = vmul.f32 %v1251, 0.3275911
        %v1264 = vmul.f32 %v1252, 0.3275911
        %v1265 = vmul.f32 %v1253, 0.3275911
        %v1266 = vmul.f32 %v1254, 0.3275911
        %v1267 = vmul.f32 %v1255, 0.3275911
        %v1268 = vmul.f32 %v1256, 0.3275911
        %v1269 = vadd.f32 %v1257, 1.0
        %v1270 = vadd.f32 %v1258, 1.0
        %v1271 = vadd.f32 %v1259, 1.0
        %v1272 = vadd.f32 %v1260, 1.0
        %v1273 = vadd.f32 %v1261, 1.0
        %v1274 = vadd.f32 %v1262, 1.0
        %v1275 = vadd.f32 %v1263, 1.0
        %v1276 = vadd.f32 %v1264, 1.0
        %v1277 = vadd.f32 %v1265, 1.0
        %v1278 = vadd.f32 %v1266, 1.0
        %v1279 = vadd.f32 %v1267, 1.0
        %v1280 = vadd.f32 %v1268, 1.0
        %v1281 = vrcp.pop %v1269
        %v1282 = vmul.f32 1.0, %v1281
        %v1283 = vrcp.pop %v1270
        %v1284 = vmul.f32 1.0, %v1283
        %v1285 = vrcp.pop %v1271
        %v1286 = vmul.f32 1.0, %v1285
        %v1287 = vrcp.pop %v1272
        %v1288 = vmul.f32 1.0, %v1287
        %v1289 = vrcp.pop %v1273
        %v1290 = vmul.f32 1.0, %v1289
        %v1291 = vrcp.pop %v1274
        %v1292 = vmul.f32 1.0, %v1291
        %v1293 = vrcp.pop %v1275
        %v1294 = vmul.f32 1.0, %v1293
        %v1295 = vrcp.pop %v1276
        %v1296 = vmul.f32 1.0, %v1295
        %v1297 = vrcp.pop %v1277
        %v1298 = vmul.f32 1.0, %v1297
        %v1299 = vrcp.pop %v1278
        %v1300 = vmul.f32 1.0, %v1299
        %v1301 = vrcp.pop %v1279
        %v1302 = vmul.f32 1.0, %v1301
        %v1303 = vrcp.pop %v1280
        %v1304 = vmul.f32 1.0, %v1303
        %v1305 = vmul.f32 %v1282, 1.0614054
        %v1306 = vmul.f32 %v1284, 1.0614054
        %v1307 = vmul.f32 %v1286, 1.0614054
        %v1308 = vmul.f32 %v1288, 1.0614054
        %v1309 = vmul.f32 %v1290, 1.0614054
        %v1310 = vmul.f32 %v1292, 1.0614054
        %v1311 = vmul.f32 %v1294, 1.0614054
        %v1312 = vmul.f32 %v1296, 1.0614054
        %v1313 = vmul.f32 %v1298, 1.0614054
        %v1314 = vmul.f32 %v1300, 1.0614054
        %v1315 = vmul.f32 %v1302, 1.0614054
        %v1316 = vmul.f32 %v1304, 1.0614054
        %v1317 = vadd.f32 %v1305, -1.4531521
        %v1318 = vadd.f32 %v1306, -1.4531521
        %v1319 = vadd.f32 %v1307, -1.4531521
        %v1320 = vadd.f32 %v1308, -1.4531521
        %v1321 = vadd.f32 %v1309, -1.4531521
        %v1322 = vadd.f32 %v1310, -1.4531521
        %v1323 = vadd.f32 %v1311, -1.4531521
        %v1324 = vadd.f32 %v1312, -1.4531521
        %v1325 = vadd.f32 %v1313, -1.4531521
        %v1326 = vadd.f32 %v1314, -1.4531521
        %v1327 = vadd.f32 %v1315, -1.4531521
        %v1328 = vadd.f32 %v1316, -1.4531521
        %v1329 = vmul.f32 %v1317, %v1282
        %v1330 = vmul.f32 %v1318, %v1284
        %v1331 = vmul.f32 %v1319, %v1286
        %v1332 = vmul.f32 %v1320, %v1288
        %v1333 = vmul.f32 %v1321, %v1290
        %v1334 = vmul.f32 %v1322, %v1292
        %v1335 = vmul.f32 %v1323, %v1294
        %v1336 = vmul.f32 %v1324, %v1296
        %v1337 = vmul.f32 %v1325, %v1298
        %v1338 = vmul.f32 %v1326, %v1300
        %v1339 = vmul.f32 %v1327, %v1302
        %v1340 = vmul.f32 %v1328, %v1304
        %v1341 = vadd.f32 %v1329, 1.4214138
        %v1342 = vadd.f32 %v1330, 1.4214138
        %v1343 = vadd.f32 %v1331, 1.4214138
        %v1344 = vadd.f32 %v1332, 1.4214138
        %v1345 = vadd.f32 %v1333, 1.4214138
        %v1346 = vadd.f32 %v1334, 1.4214138
        %v1347 = vadd.f32 %v1335, 1.4214138
        %v1348 = vadd.f32 %v1336, 1.4214138
        %v1349 = vadd.f32 %v1337, 1.4214138
        %v1350 = vadd.f32 %v1338, 1.4214138
        %v1351 = vadd.f32 %v1339, 1.4214138
        %v1352 = vadd.f32 %v1340, 1.4214138
        %v1353 = vmul.f32 %v1341, %v1282
        %v1354 = vmul.f32 %v1342, %v1284
        %v1355 = vmul.f32 %v1343, %v1286
        %v1356 = vmul.f32 %v1344, %v1288
        %v1357 = vmul.f32 %v1345, %v1290
        %v1358 = vmul.f32 %v1346, %v1292
        %v1359 = vmul.f32 %v1347, %v1294
        %v1360 = vmul.f32 %v1348, %v1296
        %v1361 = vmul.f32 %v1349, %v1298
        %v1362 = vmul.f32 %v1350, %v1300
        %v1363 = vmul.f32 %v1351, %v1302
        %v1364 = vmul.f32 %v1352, %v1304
        %v1365 = vadd.f32 %v1353, -0.28449672
        %v1366 = vadd.f32 %v1354, -0.28449672
        %v1367 = vadd.f32 %v1355, -0.28449672
        %v1368 = vadd.f32 %v1356, -0.28449672
        %v1369 = vadd.f32 %v1357, -0.28449672
        %v1370 = vadd.f32 %v1358, -0.28449672
        %v1371 = vadd.f32 %v1359, -0.28449672
        %v1372 = vadd.f32 %v1360, -0.28449672
        %v1373 = vadd.f32 %v1361, -0.28449672
        %v1374 = vadd.f32 %v1362, -0.28449672
        %v1375 = vadd.f32 %v1363, -0.28449672
        %v1376 = vadd.f32 %v1364, -0.28449672
        %v1377 = vmul.f32 %v1365, %v1282
        %v1378 = vmul.f32 %v1366, %v1284
        %v1379 = vmul.f32 %v1367, %v1286
        %v1380 = vmul.f32 %v1368, %v1288
        %v1381 = vmul.f32 %v1369, %v1290
        %v1382 = vmul.f32 %v1370, %v1292
        %v1383 = vmul.f32 %v1371, %v1294
        %v1384 = vmul.f32 %v1372, %v1296
        %v1385 = vmul.f32 %v1373, %v1298
        %v1386 = vmul.f32 %v1374, %v1300
        %v1387 = vmul.f32 %v1375, %v1302
        %v1388 = vmul.f32 %v1376, %v1304
        %v1389 = vadd.f32 %v1377, 0.2548296
        %v1390 = vadd.f32 %v1378, 0.2548296
        %v1391 = vadd.f32 %v1379, 0.2548296
        %v1392 = vadd.f32 %v1380, 0.2548296
        %v1393 = vadd.f32 %v1381, 0.2548296
        %v1394 = vadd.f32 %v1382, 0.2548296
        %v1395 = vadd.f32 %v1383, 0.2548296
        %v1396 = vadd.f32 %v1384, 0.2548296
        %v1397 = vadd.f32 %v1385, 0.2548296
        %v1398 = vadd.f32 %v1386, 0.2548296
        %v1399 = vadd.f32 %v1387, 0.2548296
        %v1400 = vadd.f32 %v1388, 0.2548296
        %v1401 = vmul.f32 %v1389, %v1282
        %v1402 = vmul.f32 %v1390, %v1284
        %v1403 = vmul.f32 %v1391, %v1286
        %v1404 = vmul.f32 %v1392, %v1288
        %v1405 = vmul.f32 %v1393, %v1290
        %v1406 = vmul.f32 %v1394, %v1292
        %v1407 = vmul.f32 %v1395, %v1294
        %v1408 = vmul.f32 %v1396, %v1296
        %v1409 = vmul.f32 %v1397, %v1298
        %v1410 = vmul.f32 %v1398, %v1300
        %v1411 = vmul.f32 %v1399, %v1302
        %v1412 = vmul.f32 %v1400, %v1304
        %v1413 = vsub.f32 0.0, %v1245
        %v1414 = vsub.f32 0.0, %v1246
        %v1415 = vsub.f32 0.0, %v1247
        %v1416 = vsub.f32 0.0, %v1248
        %v1417 = vsub.f32 0.0, %v1249
        %v1418 = vsub.f32 0.0, %v1250
        %v1419 = vsub.f32 0.0, %v1251
        %v1420 = vsub.f32 0.0, %v1252
        %v1421 = vsub.f32 0.0, %v1253
        %v1422 = vsub.f32 0.0, %v1254
        %v1423 = vsub.f32 0.0, %v1255
        %v1424 = vsub.f32 0.0, %v1256
        %v1425 = vmul.f32 %v1413, %v1245
        %v1426 = vmul.f32 %v1414, %v1246
        %v1427 = vmul.f32 %v1415, %v1247
        %v1428 = vmul.f32 %v1416, %v1248
        %v1429 = vmul.f32 %v1417, %v1249
        %v1430 = vmul.f32 %v1418, %v1250
        %v1431 = vmul.f32 %v1419, %v1251
        %v1432 = vmul.f32 %v1420, %v1252
        %v1433 = vmul.f32 %v1421, %v1253
        %v1434 = vmul.f32 %v1422, %v1254
        %v1435 = vmul.f32 %v1423, %v1255
        %v1436 = vmul.f32 %v1424, %v1256
        %v1437 = vmul.f32 %v1425, 1.442695
        %v1438 = vpow.pop %v1437
        %v1439 = vmul.f32 %v1426, 1.442695
        %v1440 = vpow.pop %v1439
        %v1441 = vmul.f32 %v1427, 1.442695
        %v1442 = vpow.pop %v1441
        %v1443 = vmul.f32 %v1428, 1.442695
        %v1444 = vpow.pop %v1443
        %v1445 = vmul.f32 %v1429, 1.442695
        %v1446 = vpow.pop %v1445
        %v1447 = vmul.f32 %v1430, 1.442695
        %v1448 = vpow.pop %v1447
        %v1449 = vmul.f32 %v1431, 1.442695
        %v1450 = vpow.pop %v1449
        %v1451 = vmul.f32 %v1432, 1.442695
        %v1452 = vpow.pop %v1451
        %v1453 = vmul.f32 %v1433, 1.442695
        %v1454 = vpow.pop %v1453
        %v1455 = vmul.f32 %v1434, 1.442695
        %v1456 = vpow.pop %v1455
        %v1457 = vmul.f32 %v1435, 1.442695
        %v1458 = vpow.pop %v1457
        %v1459 = vmul.f32 %v1436, 1.442695
        %v1460 = vpow.pop %v1459
        %v1461 = vmul.f32 %v1401, %v1438
        %v1462 = vmul.f32 %v1402, %v1440
        %v1463 = vmul.f32 %v1403, %v1442
        %v1464 = vmul.f32 %v1404, %v1444
        %v1465 = vmul.f32 %v1405, %v1446
        %v1466 = vmul.f32 %v1406, %v1448
        %v1467 = vmul.f32 %v1407, %v1450
        %v1468 = vmul.f32 %v1408, %v1452
        %v1469 = vmul.f32 %v1409, %v1454
        %v1470 = vmul.f32 %v1410, %v1456
        %v1471 = vmul.f32 %v1411, %v1458
        %v1472 = vmul.f32 %v1412, %v1460
        %v1473 = vsub.f32 1.0, %v1461
        %v1474 = vsub.f32 1.0, %v1462
        %v1475 = vsub.f32 1.0, %v1463
        %v1476 = vsub.f32 1.0, %v1464
        %v1477 = vsub.f32 1.0, %v1465
        %v1478 = vsub.f32 1.0, %v1466
        %v1479 = vsub.f32 1.0, %v1467
        %v1480 = vsub.f32 1.0, %v1468
        %v1481 = vsub.f32 1.0, %v1469
        %v1482 = vsub.f32 1.0, %v1470
        %v1483 = vsub.f32 1.0, %v1471
        %v1484 = vsub.f32 1.0, %v1472
        %vm1485 = vcmp.ge.f32.partialorder %v1233, 0.0
        %vm1486 = vcmp.ge.f32.partialorder %v1234, 0.0
        %vm1487 = vcmp.ge.f32.partialorder %v1235, 0.0
        %vm1488 = vcmp.ge.f32.partialorder %v1236, 0.0
        %vm1489 = vcmp.ge.f32.partialorder %v1237, 0.0
        %vm1490 = vcmp.ge.f32.partialorder %v1238, 0.0
        %vm1491 = vcmp.ge.f32.partialorder %v1239, 0.0
        %vm1492 = vcmp.ge.f32.partialorder %v1240, 0.0
        %vm1493 = vcmp.ge.f32.partialorder %v1241, 0.0
        %vm1494 = vcmp.ge.f32.partialorder %v1242, 0.0
        %vm1495 = vcmp.ge.f32.partialorder %v1243, 0.0
        %vm1496 = vcmp.ge.f32.partialorder %v1244, 0.0
        %v1497 = vsub.f32 0.0, %v1473
        %v1498 = vsub.f32 0.0, %v1474
        %v1499 = vsub.f32 0.0, %v1475
        %v1500 = vsub.f32 0.0, %v1476
        %v1501 = vsub.f32 0.0, %v1477
        %v1502 = vsub.f32 0.0, %v1478
        %v1503 = vsub.f32 0.0, %v1479
        %v1504 = vsub.f32 0.0, %v1480
        %v1505 = vsub.f32 0.0, %v1481
        %v1506 = vsub.f32 0.0, %v1482
        %v1507 = vsub.f32 0.0, %v1483
        %v1508 = vsub.f32 0.0, %v1484
        %v1509 = vsel %vm1485, %v1473, %v1497
        %v1510 = vsel %vm1486, %v1474, %v1498
        %v1511 = vsel %vm1487, %v1475, %v1499
        %v1512 = vsel %vm1488, %v1476, %v1500
        %v1513 = vsel %vm1489, %v1477, %v1501
        %v1514 = vsel %vm1490, %v1478, %v1502
        %v1515 = vsel %vm1491, %v1479, %v1503
        %v1516 = vsel %vm1492, %v1480, %v1504
        %v1517 = vsel %vm1493, %v1481, %v1505
        %v1518 = vsel %vm1494, %v1482, %v1506
        %v1519 = vsel %vm1495, %v1483, %v1507
        %v1520 = vsel %vm1496, %v1484, %v1508
        %v1521 = vadd.f32 %v1509, 1.0
        %v1522 = vadd.f32 %v1510, 1.0
        %v1523 = vadd.f32 %v1511, 1.0
        %v1524 = vadd.f32 %v1512, 1.0
        %v1525 = vadd.f32 %v1513, 1.0
        %v1526 = vadd.f32 %v1514, 1.0
        %v1527 = vadd.f32 %v1515, 1.0
        %v1528 = vadd.f32 %v1516, 1.0
        %v1529 = vadd.f32 %v1517, 1.0
        %v1530 = vadd.f32 %v1518, 1.0
        %v1531 = vadd.f32 %v1519, 1.0
        %v1532 = vadd.f32 %v1520, 1.0
        %v1533 = vmul.f32 %v1221, %v1521
        %v1534 = vmul.f32 %v1222, %v1522
        %v1535 = vmul.f32 %v1223, %v1523
        %v1536 = vmul.f32 %v1224, %v1524
        %v1537 = vmul.f32 %v1225, %v1525
        %v1538 = vmul.f32 %v1226, %v1526
        %v1539 = vmul.f32 %v1227, %v1527
        %v1540 = vmul.f32 %v1228, %v1528
        %v1541 = vmul.f32 %v1229, %v1529
        %v1542 = vmul.f32 %v1230, %v1530
        %v1543 = vmul.f32 %v1231, %v1531
        %v1544 = vmul.f32 %v1232, %v1532
        %v1545 = vld [vmem:[%s7] sm:$0xff]
        %v1546 = vld [vmem:[%s7 + $0x8] sm:$0xff]
        %vm1547 = vcmask 343040
        %v1549 = vsel %vm1547, %v1545, 0
        %v1552 = vsel %vm1547, %v1546, 0
        %vm1554 = vcmask 1041408
        %v1556 = vsel %vm1554, %v1543, 0
        %v1559 = vsel %vm1554, %v1544, 0
        %1561 = vmatprep.subr.mxu0 %v1534
        %1562 = vmatpush1.msra.mxu0 %v1533
        %1563 = vmatprep.subr.mxu0 %v1536
        %1564 = vmatpush1.msra.mxu0 %v1535
        %1565 = vmatprep.subr.mxu0 %v1538
        %1566 = vmatpush1.msra.mxu0 %v1537
        %1567 = vmatprep.subr.mxu0 %v1540
        %1568 = vmatpush1.msra.mxu0 %v1539
        %1569 = vmatprep.subr.mxu0 %v1542
        %1570 = vmatpush1.msra.mxu0 %v1541
        %1571 = vmatprep.subr.mxu0 %v1559
        %1572 = vmatpush1.msra.mxu0 %v1556
        %1573 = vmatprep.subr.mxu0 0.0
        %1574 = vmatpush1.msra.mxu0 0.0
        %1575 = vmatprep.subr.mxu0 0.0
        %1576 = vmatpush1.msra.mxu0 0.0
        %1577 = vmatprep.subr.mxu0 0.0
        %1578 = vmatpush1.msra.mxu0 0.0
        %1579 = vmatprep.subr.mxu0 0.0
        %1580 = vmatpush1.msra.mxu0 0.0
        %1581 = vmatprep.subr.mxu0 0.0
        %1582 = vmatpush1.msra.mxu0 0.0
        %1583 = vmatprep.subr.mxu0 0.0
        %1584 = vmatpush1.msra.mxu0 0.0
        %1585 = vmatprep.subr.mxu0 0.0
        %1586 = vmatpush1.msra.mxu0 0.0
        %1587 = vmatprep.subr.mxu0 0.0
        %1588 = vmatpush1.msra.mxu0 0.0
        %1589 = vmatprep.subr.mxu0 0.0
        %1590 = vmatpush1.msra.mxu0 0.0
        %1591 = vmatprep.subr.mxu0 0.0
        %1592 = vmatpush1.msra.mxu0 0.0
        %1593 = vmatprep.subr.mxu0 0.0
        %1594 = vmatpush1.msra.mxu0 0.0
        %1595 = vmatprep.subr.mxu0 0.0
        %1596 = vmatpush1.msra.mxu0 0.0
        %1597 = vmatprep.subr.mxu0 0.0
        %1598 = vmatpush1.msra.mxu0 0.0
        %1599 = vmatprep.subr.mxu0 0.0
        %1600 = vmatpush1.msra.mxu0 0.0
        %1601 = vmatprep.subr.mxu0 0.0
        %1602 = vmatpush1.msra.mxu0 0.0
        %1603 = vmatprep.subr.mxu0 0.0
        %1604 = vmatpush1.msra.mxu0 0.0
        %1605 = vmatprep.subr.mxu0 0.0
        %1606 = vmatpush1.msra.mxu0 0.0
        %1607 = vmatprep.subr.mxu0 0.0
        %1608 = vmatpush1.msra.mxu0 0.0
        %1609 = vmatprep.subr.mxu0 0.0
        %1610 = vmatpush1.msra.mxu0 0.0
        %1611 = vmatprep.subr.mxu0 0.0
        %1612 = vmatpush1.msra.mxu0 0.0
        %1613 = vmatprep.subr.mxu0 0.0
        %1614 = vmatpush1.msra.mxu0 0.0
        %1615 = vmatprep.subr.mxu0 0.0
        %1616 = vmatpush1.msra.mxu0 0.0
        %1617 = vmatprep.subr.mxu0 0.0
        %1618 = vmatpush1.msra.mxu0 0.0
        %1619 = vmatprep.subr.mxu0 0.0
        %1620 = vmatpush1.msra.mxu0 0.0
        %1621 = vmatprep.subr.mxu0 0.0
        %1622 = vmatpush1.msra.mxu0 0.0
        %1623 = vmatprep.subr.mxu0 0.0
        %1624 = vmatpush1.msra.mxu0 0.0
        %1625 = vmatprep.mubr.f32.mxu0 0.0
        %1626 = vmatmul.mubr.f32.gmra.mrb[0].mxu0 %v1549
        %v1627 = vpop.f32.mrb[0].mxu0
        %v1628 = vadd.f32 0.0, %v1627
        %v1629 = vpop.f32.mrb[0].mxu0
        %v1630 = vadd.f32 0.0, %v1629
        %1631 = vmatprep.mubr.f32.mxu0 0.0
        %1632 = vmatmul.mubr.f32.gmra.mrb[0].mxu0 %v1552
        %v1633 = vpop.f32.mrb[0].mxu0
        %v1634 = vadd.f32 0.0, %v1633
        %v1635 = vpop.f32.mrb[0].mxu0
        %v1636 = vadd.f32 0.0, %v1635
        %1637 = vdwg.mxu0
        %1638 = vst [vmem:[%s344] sm:$0xff] %v1628
        %1639 = vst [vmem:[%s344 + $0x8] sm:$0xff] %v1630
        %1640 = vst [vmem:[%s344 + $0x10] sm:$0xff] %v1634
        %1641 = vst [vmem:[%s344 + $0x18] sm:$0xff] %v1636
        %s1642 = sand.u32 %s204, 1
        %s1643 = scalar_lea.sflag [#allocation5], %s1642
        %s1644 = sand.u32 %s204, 1
        %s1645 = smul.addr %s1644, 32
        %s1646 = scalar_lea.vmem [#allocation6], %s1645
        // Predicated region
        $region80: #{tpu_custom_call.1} parent=70 // pred_check
          %p1647 = pneg %p214
        $region81: #{tpu_custom_call.1} parent=70 // pred_check_branch
          %1649 = sbr.rel (%p1647) target = $region83
        $region82: #{tpu_custom_call.1} parent=70 // pred_region
          %s1650 = smul.u32 2, %s23
          %s1652 = ssub.s32 512, 512
          %1653 = vsyncadd %s1643, %s1652
          %s1654 = smul.addr %s1650, 128
          %s1655 = scalar_lea.hbm %s8, %s1654
          %s1656 = sshll.u32 %s1646, 4
          %s1657 = int_to_ptr.vmem [resolvable:$true] %s1656
          %1662 = dma.vmem_to_hbm [thread:$0]  %s1657, 512, %s1655, %s1643, 256, 512, 16
        $region83: #{tpu_custom_call.1} parent=70 // pred_fallthru
          _
      $region71: #{tpu_custom_call.1} parent=5 // pred_fallthru
        _
      %p1663 = scmp.le.s32.totalorder 2, %s18
      // Predicated region
      $region84: #{tpu_custom_call.1} parent=5 // pred_check
        %p1664 = pneg %p1663
      $region85: #{tpu_custom_call.1} parent=5 // pred_check_branch
        %1666 = sbr.rel (%p1664) target = $region87
      $region86: #{tpu_custom_call.1} parent=5 // pred_region
        %s1667 = ssub.s32 %s18, 2
        // Predicated region
        $region88: #{tpu_custom_call.1} parent=86 // pred_check
          %p1668 = pneg %p220
        $region89: #{tpu_custom_call.1} parent=86 // pred_check_branch
          %1670 = sbr.rel (%p1668) target = $region91
        $region90: #{tpu_custom_call.1} parent=86 // pred_region
          %s1671 = sand.u32 %s205, 1
          %s1672 = scalar_lea.sflag [#allocation5], %s1671
          %s1673 = sand.u32 %s205, 1
          %s1674 = smul.addr %s1673, 32
          %s1675 = scalar_lea.vmem [#allocation6], %s1674
          %1676 = dma.done %s1672, 512
        $region91: #{tpu_custom_call.1} parent=86 // pred_fallthru
          _
      $region87: #{tpu_custom_call.1} parent=5 // pred_fallthru
        _
    $region6: #{tpu_custom_call.1} parent=1 // loop_footer
      %s22 = sadd.s32 1, %s18
    $region7: #{tpu_custom_call.1} parent=1 // loop_footer_branch
      %17 = sbr.rel target = $region3
    $region8: #{tpu_custom_call.1} parent=1 // loop_exit
      _
    %1677 = vsyncpa [#allocation4], 1
    %s1678 = scalar_lea.sflag [#allocation4], 1
    %1679 = vsyncpa %s1678, 1
    %1680 = vsyncpa [#allocation5], 1
    %s1681 = scalar_lea.sflag [#allocation5], 1
    %1682 = vsyncpa %s1681, 1

</llo_original>
